<compile_context>
chip_gen: v7x
topology: tpu7x:2x2x1
jax: 0.10.0
libtpu: 0.0.40
codegen_flags: <defaults>
</compile_context>

<pallas_src>
import math
import functools

import jax
import jax.numpy as jnp
from jax.experimental import pallas as pl
from jax.experimental.pallas import tpu as pltpu


_NEG_BIG = -1e30  # finite "-inf": keeps online-softmax stats finite for masked slots


def _layernorm_f32(x, scale, shift, eps=1e-5):
    # x: [T, D] f32, scale/shift: [1, D] f32   (unbiased=False variance)
    mean = jnp.mean(x, axis=-1, keepdims=True)
    var = jnp.mean((x - mean) ** 2, axis=-1, keepdims=True)
    norm = (x - mean) * jax.lax.rsqrt(var + eps)
    return scale * norm + shift


def _gelu_tanh(x):
    c = math.sqrt(2.0 / math.pi)
    return 0.5 * x * (1.0 + jnp.tanh(c * (x + 0.044715 * (x * x * x))))


def transformer_block_kernel(
    x_ref,                                  # (1, T, D)  f32
    wq_ref, wk_ref, wv_ref,                 # (D, D)     bf16 (y = x @ W layout)
    wo_ref, bo_ref,                         # (D, D) bf16, (1, D) f32
    ln1_s_ref, ln1_b_ref,                   # (1, D)     f32
    ln2_s_ref, ln2_b_ref,                   # (1, D)     f32
    w1_ref, b1_ref,                         # (D, 4D) bf16, (1, 4D) f32
    w2_ref, b2_ref,                         # (4D, D) bf16, (1, D) f32
    o_ref,                                  # (1, T, D)  f32
    ctx_ref,                                # (T, D)     f32 VMEM scratch
    *, num_heads, q_tile, kv_tile, f_tile,
):
    x = x_ref[0].astype(jnp.float32)        # [T, D]
    T, D = x.shape
    H = num_heads
    hd = D // H
    nq = T // q_tile

    # ---- norm1 + QKV projections (bf16 operands, f32 accumulation) ----
    xn = _layernorm_f32(x, ln1_s_ref[...], ln1_b_ref[...])
    xn_b = xn.astype(jnp.bfloat16)
    q = jnp.dot(xn_b, wq_ref[...], preferred_element_type=jnp.float32)
    k = jnp.dot(xn_b, wk_ref[...], preferred_element_type=jnp.float32)
    v = jnp.dot(xn_b, wv_ref[...], preferred_element_type=jnp.float32)

    # Fold 1/sqrt(hd) into q once; cast to bf16 once for all attention matmuls.
    q_b = (q * jnp.float32(1.0 / math.sqrt(hd))).astype(jnp.bfloat16)
    k_b = k.astype(jnp.bfloat16)
    v_b = v.astype(jnp.bfloat16)

    # ---- causal attention: per-head, per-q-tile online softmax over KV tiles ----
    for h in range(H):
        c0, c1 = h * hd, (h + 1) * hd                     # lane-contiguous head slice
        for qi in range(nq):
            r0 = qi * q_tile
            qt = q_b[r0:r0 + q_tile, c0:c1]               # [TQ, hd]
            m_i = jnp.full((q_tile, 1), _NEG_BIG, jnp.float32)
            l_i = jnp.zeros((q_tile, 1), jnp.float32)
            acc = jnp.zeros((q_tile, hd), jnp.float32)

            # Only KV tiles at or below the diagonal contribute; later tiles are
            # fully masked and skipped entirely (trace-time static skip).
            n_kv = -(-(r0 + q_tile) // kv_tile)           # ceil div
            for j in range(n_kv):
                s0 = j * kv_tile
                kt = k_b[s0:s0 + kv_tile, c0:c1]          # [TK, hd]
                vt = v_b[s0:s0 + kv_tile, c0:c1]          # [TK, hd]
                s = jnp.dot(qt, kt.T, preferred_element_type=jnp.float32)  # [TQ, TK]

                if s0 + kv_tile - 1 > r0:                 # tile touches the diagonal
                    row = r0 + jax.lax.broadcasted_iota(jnp.int32, (q_tile, kv_tile), 0)
                    col = s0 + jax.lax.broadcasted_iota(jnp.int32, (q_tile, kv_tile), 1)
                    s = jnp.where(col > row, _NEG_BIG, s)

                m_new = jnp.maximum(m_i, jnp.max(s, axis=-1, keepdims=True))
                alpha = jnp.exp(m_i - m_new)
                p = jnp.exp(s - m_new)
                l_i = alpha * l_i + jnp.sum(p, axis=-1, keepdims=True)
                acc = alpha * acc + jnp.dot(p.astype(jnp.bfloat16), vt,
                                            preferred_element_type=jnp.float32)
                m_i = m_new

            # EUP reciprocal instead of a VPU divide pass; static lane-slice store.
            ctx_ref[r0:r0 + q_tile, c0:c1] = acc * pl.reciprocal(l_i, approx=True)

    # Single full-width output projection (heads already concatenated in-place).
    attn_out = jnp.dot(ctx_ref[...].astype(jnp.bfloat16), wo_ref[...],
                       preferred_element_type=jnp.float32) + bo_ref[...]

    x1 = x + attn_out                       # residual 1 (drop_shortcut is identity)

    # ---- norm2 + FFN, chunked over the 4*D hidden dimension ----
    xn2_b = _layernorm_f32(x1, ln2_s_ref[...], ln2_b_ref[...]).astype(jnp.bfloat16)
    Fdim = w1_ref.shape[1]
    ff = jnp.zeros((T, D), jnp.float32)
    for f0 in range(0, Fdim, f_tile):
        w1c = w1_ref[:, f0:f0 + f_tile]                   # (D, FC) bf16
        b1c = b1_ref[:, f0:f0 + f_tile]                   # (1, FC) f32
        hc = jnp.dot(xn2_b, w1c, preferred_element_type=jnp.float32) + b1c
        hc = _gelu_tanh(hc)                               # f32 (v5e-safe elementwise)
        ff = ff + jnp.dot(hc.astype(jnp.bfloat16), w2_ref[f0:f0 + f_tile, :],
                          preferred_element_type=jnp.float32)
    ff = ff + b2_ref[...]

    # residual 2
    o_ref[0] = (x1 + ff).astype(o_ref.dtype)


def transformer_block(x, params, num_heads):
    B, T, D = x.shape
    F = params["w1"].shape[1]

    # Tile sizes: collapse to full extents at toy shapes; 256-aligned at real
    # sizes (good for v6e/v7x MXU; still 128-multiples for v5e).
    q_tile = T if T <= 256 else 256
    kv_tile = T if T <= 256 else 256
    f_tile = F if F <= 1024 else 1024
    assert T % q_tile == 0 and T % kv_tile == 0 and F % f_tile == 0, \
        "token / hidden dims must be divisible by the tile sizes"

    def rep2(shape):
        # Whole-array 2D block, constant index across the batch grid.
        # NOTE: constant-index weights only need a single buffer
        # (pipeline_mode=pl.Buffered(1)); left at the default for portability.
        return pl.BlockSpec(shape, lambda b: (0, 0))

    in_specs = [
        pl.BlockSpec((1, T, D), lambda b: (b, 0, 0)),     # x
        rep2((D, D)), rep2((D, D)), rep2((D, D)),          # Wq, Wk, Wv (bf16)
        rep2((D, D)), rep2((1, D)),                        # Wo (bf16), bo
        rep2((1, D)), rep2((1, D)),                        # ln1 scale/shift
        rep2((1, D)), rep2((1, D)),                        # ln2 scale/shift
        rep2((D, F)), rep2((1, F)),                        # W1 (bf16), b1
        rep2((F, D)), rep2((1, D)),                        # W2 (bf16), b2
    ]

    # Explicit VMEM budget: bf16 weights + f32 activation slabs, x2 for
    # double-buffering + slack, clamped to 64 MiB (v7x physical VMEM).
    w_bytes = 2 * (4 * D * D + 2 * D * F)
    act_bytes = 4 * T * D * 12 + 4 * T * max(f_tile, D)
    vmem_limit = min(max(2 * (w_bytes + act_bytes) + (4 << 20), 32 << 20), 64 << 20)

    kernel = functools.partial(
        transformer_block_kernel, num_heads=num_heads,
        q_tile=q_tile, kv_tile=kv_tile, f_tile=f_tile)

    return pl.pallas_call(
        kernel,
        out_shape=jax.ShapeDtypeStruct((B, T, D), x.dtype),
        grid_spec=pltpu.PrefetchScalarGridSpec(
            num_scalar_prefetch=0,
            grid=(B,),
            in_specs=in_specs,
            out_specs=pl.BlockSpec((1, T, D), lambda b: (b, 0, 0)),
            scratch_shapes=[pltpu.VMEM((T, D), jnp.float32)],   # ctx (heads concat)
        ),
        compiler_params=pltpu.CompilerParams(
            dimension_semantics=("parallel",),
            vmem_limit_bytes=int(vmem_limit),
        ),
    )(
        x,
        params["wq"], params["wk"], params["wv"],
        params["wo"], params["bo"],
        params["ln1_s"], params["ln1_b"],
        params["ln2_s"], params["ln2_b"],
        params["w1"], params["b1"],
        params["w2"], params["b2"],
    )


def init_params(key, D):
    F = 4 * D
    ks = jax.random.split(key, 6)
    s = 0.02

    def w(k, shape):
        # Linear weights stored pre-transposed (y = x @ W + b) and in bf16 so the
        # MXU gets bf16 operands and HBM/VMEM traffic is halved.
        return (jax.random.normal(k, shape, jnp.float32) * s).astype(jnp.bfloat16)

    return {
        "wq": w(ks[0], (D, D)),
        "wk": w(ks[1], (D, D)),
        "wv": w(ks[2], (D, D)),
        "wo": w(ks[3], (D, D)),
        "bo": jnp.zeros((1, D), jnp.float32),
        "ln1_s": jnp.ones((1, D), jnp.float32),
        "ln1_b": jnp.zeros((1, D), jnp.float32),
        "ln2_s": jnp.ones((1, D), jnp.float32),
        "ln2_b": jnp.zeros((1, D), jnp.float32),
        "w1": w(ks[4], (D, F)),
        "b1": jnp.zeros((1, F), jnp.float32),
        "w2": w(ks[5], (F, D)),
        "b2": jnp.zeros((1, D), jnp.float32),
    }


def reference_block(x, p, num_heads):
    # Pure-JAX f32 reference of the PyTorch forward (eval-mode dropout).
    B, T, D = x.shape
    H, hd = num_heads, D // num_heads
    f32 = lambda a: a.astype(jnp.float32)

    def ln(v, scale, shift):
        mean = jnp.mean(v, -1, keepdims=True)
        var = jnp.mean((v - mean) ** 2, -1, keepdims=True)
        return scale * ((v - mean) / jnp.sqrt(var + 1e-5)) + shift

    xn = ln(x, p["ln1_s"], p["ln1_b"])
    q = (xn @ f32(p["wq"])).reshape(B, T, H, hd).transpose(0, 2, 1, 3)
    k = (xn @ f32(p["wk"])).reshape(B, T, H, hd).transpose(0, 2, 1, 3)
    v = (xn @ f32(p["wv"])).reshape(B, T, H, hd).transpose(0, 2, 1, 3)
    scores = jnp.einsum("bhtd,bhsd->bhts", q, k)
    mask = jnp.triu(jnp.ones((T, T), bool), 1)
    scores = jnp.where(mask, -jnp.inf, scores)
    attn = jax.nn.softmax(scores / math.sqrt(hd), axis=-1)
    ctx = jnp.einsum("bhts,bhsd->bhtd", attn, v).transpose(0, 2, 1, 3).reshape(B, T, D)
    x1 = x + ctx @ f32(p["wo"]) + p["bo"]
    xn2 = ln(x1, p["ln2_s"], p["ln2_b"])
    h = xn2 @ f32(p["w1"]) + p["b1"]
    c = math.sqrt(2.0 / math.pi)
    h = 0.5 * h * (1.0 + jnp.tanh(c * (h + 0.044715 * h ** 3)))
    return x1 + h @ f32(p["w2"]) + p["b2"]


if __name__ == "__main__":
    # cfg: emb_dim=32, context_length=8, n_heads=4, drop_rate=0.0, qkv_bias=False
    # NOTE: this toy shape cannot exercise the MXU (D=32 < 128 lanes); it only
    # validates correctness. Do not benchmark at these shapes.
    B, T, D, H = 2, 8, 32, 4
    key = jax.random.PRNGKey(0)
    kx, kp = jax.random.split(key)
    x = jax.random.normal(kx, (B, T, D), jnp.float32)
    params = init_params(kp, D)

    out = jax.block_until_ready(transformer_block(x, params, num_heads=H))
    ref = reference_block(x, params, H)
    assert out.shape == (B, T, D)
    assert jnp.allclose(out, ref, atol=1e-2, rtol=1e-2), "mismatch vs reference"
    print("KERNEL_OK")
</pallas_src>

<mosaic_0001>
module attributes {stable_mosaic.version = 11 : i64} {
  func.func @transformer_block_kernel(%arg0: i32, %arg1: memref<1x8x32xf32, #tpu.memory_space<vmem>>, %arg2: memref<32x32xbf16, #tpu.memory_space<vmem>>, %arg3: memref<32x32xbf16, #tpu.memory_space<vmem>>, %arg4: memref<32x32xbf16, #tpu.memory_space<vmem>>, %arg5: memref<32x32xbf16, #tpu.memory_space<vmem>>, %arg6: memref<1x32xf32, #tpu.memory_space<vmem>>, %arg7: memref<1x32xf32, #tpu.memory_space<vmem>>, %arg8: memref<1x32xf32, #tpu.memory_space<vmem>>, %arg9: memref<1x32xf32, #tpu.memory_space<vmem>>, %arg10: memref<1x32xf32, #tpu.memory_space<vmem>>, %arg11: memref<32x128xbf16, #tpu.memory_space<vmem>>, %arg12: memref<1x128xf32, #tpu.memory_space<vmem>>, %arg13: memref<128x32xbf16, #tpu.memory_space<vmem>>, %arg14: memref<1x32xf32, #tpu.memory_space<vmem>>, %arg15: memref<1x8x32xf32, #tpu.memory_space<vmem>>, %arg16: memref<8x32xf32, #tpu.memory_space<vmem>>) attributes {dimension_semantics = [#tpu.dimension_semantics<parallel>], iteration_bounds = array<i64: 2>, scalar_prefetch = 0 : i64, scratch_operands = 1 : i64, tpu.core_type = #tpu.core_type<tc>, window_params = [{transform_indices = @transform_0, window_bounds = array<i64: 1, 8, 32>}, {pipeline_mode = #tpu.pipeline_mode<synchronous>, transform_indices = @transform_1, window_bounds = array<i64: 32, 32>}, {pipeline_mode = #tpu.pipeline_mode<synchronous>, transform_indices = @transform_2, window_bounds = array<i64: 32, 32>}, {pipeline_mode = #tpu.pipeline_mode<synchronous>, transform_indices = @transform_3, window_bounds = array<i64: 32, 32>}, {pipeline_mode = #tpu.pipeline_mode<synchronous>, transform_indices = @transform_4, window_bounds = array<i64: 32, 32>}, {pipeline_mode = #tpu.pipeline_mode<synchronous>, transform_indices = @transform_5, window_bounds = array<i64: 1, 32>}, {pipeline_mode = #tpu.pipeline_mode<synchronous>, transform_indices = @transform_6, window_bounds = array<i64: 1, 32>}, {pipeline_mode = #tpu.pipeline_mode<synchronous>, transform_indices = @transform_7, window_bounds = array<i64: 1, 32>}, {pipeline_mode = #tpu.pipeline_mode<synchronous>, transform_indices = @transform_8, window_bounds = array<i64: 1, 32>}, {pipeline_mode = #tpu.pipeline_mode<synchronous>, transform_indices = @transform_9, window_bounds = array<i64: 1, 32>}, {pipeline_mode = #tpu.pipeline_mode<synchronous>, transform_indices = @transform_10, window_bounds = array<i64: 32, 128>}, {pipeline_mode = #tpu.pipeline_mode<synchronous>, transform_indices = @transform_11, window_bounds = array<i64: 1, 128>}, {pipeline_mode = #tpu.pipeline_mode<synchronous>, transform_indices = @transform_12, window_bounds = array<i64: 128, 32>}, {pipeline_mode = #tpu.pipeline_mode<synchronous>, transform_indices = @transform_13, window_bounds = array<i64: 1, 32>}, {transform_indices = @transform_14, window_bounds = array<i64: 1, 8, 32>}]} {
    %c0 = arith.constant 0 : index
    %c0_0 = arith.constant 0 : index
    %c0_1 = arith.constant 0 : index
    %0 = vector.load %arg1[%c0, %c0_0, %c0_1] : memref<1x8x32xf32, #tpu.memory_space<vmem>>, vector<1x8x32xf32>
    %1 = vector.shape_cast %0 : vector<1x8x32xf32> to vector<8x32xf32>
    %c0_2 = arith.constant 0 : index
    %c0_3 = arith.constant 0 : index
    %2 = vector.load %arg7[%c0_2, %c0_3] : memref<1x32xf32, #tpu.memory_space<vmem>>, vector<1x32xf32>
    %c0_4 = arith.constant 0 : index
    %c0_5 = arith.constant 0 : index
    %3 = vector.load %arg8[%c0_4, %c0_5] : memref<1x32xf32, #tpu.memory_space<vmem>>, vector<1x32xf32>
    %cst = arith.constant dense<0.000000e+00> : vector<8xf32>
    %4 = vector.multi_reduction <add>, %1, %cst [1] : vector<8x32xf32> to vector<8xf32>
    %5 = vector.shape_cast %4 : vector<8xf32> to vector<8x1xf32>
    %cst_6 = arith.constant 3.200000e+01 : f32
    %6 = vector.broadcast %cst_6 : f32 to vector<8x1xf32>
    %7 = arith.divf %5, %6 : vector<8x1xf32>
    %8 = vector.broadcast %7 : vector<8x1xf32> to vector<8x32xf32>
    %9 = arith.subf %1, %8 : vector<8x32xf32>
    %10 = arith.mulf %9, %9 : vector<8x32xf32>
    %cst_7 = arith.constant dense<0.000000e+00> : vector<8xf32>
    %11 = vector.multi_reduction <add>, %10, %cst_7 [1] : vector<8x32xf32> to vector<8xf32>
    %12 = vector.shape_cast %11 : vector<8xf32> to vector<8x1xf32>
    %cst_8 = arith.constant 3.200000e+01 : f32
    %13 = vector.broadcast %cst_8 : f32 to vector<8x1xf32>
    %14 = arith.divf %12, %13 : vector<8x1xf32>
    %15 = vector.broadcast %7 : vector<8x1xf32> to vector<8x32xf32>
    %16 = arith.subf %1, %15 : vector<8x32xf32>
    %cst_9 = arith.constant 9.99999974E-6 : f32
    %17 = vector.broadcast %cst_9 : f32 to vector<8x1xf32>
    %18 = arith.addf %14, %17 : vector<8x1xf32>
    %19 = math.rsqrt %18 : vector<8x1xf32>
    %20 = vector.broadcast %19 : vector<8x1xf32> to vector<8x32xf32>
    %21 = arith.mulf %16, %20 : vector<8x32xf32>
    %22 = vector.broadcast %2 : vector<1x32xf32> to vector<8x32xf32>
    %23 = arith.mulf %22, %21 : vector<8x32xf32>
    %24 = vector.broadcast %3 : vector<1x32xf32> to vector<8x32xf32>
    %25 = arith.addf %23, %24 : vector<8x32xf32>
    %26 = arith.truncf %25 : vector<8x32xf32> to vector<8x32xbf16>
    %c0_10 = arith.constant 0 : index
    %c0_11 = arith.constant 0 : index
    %27 = vector.load %arg2[%c0_10, %c0_11] : memref<32x32xbf16, #tpu.memory_space<vmem>>, vector<32x32xbf16>
    %cst_12 = arith.constant dense<0.000000e+00> : vector<8x32xf32>
    %28 = tpu.matmul %26, %27, %cst_12 {dimension_numbers = #tpu.dot_dimension_numbers<[1], [0], [0], [1], [0, 0, 1, 1], [], []>} : vector<8x32xbf16>, vector<32x32xbf16>, vector<8x32xf32> -> vector<8x32xf32>
    %c0_13 = arith.constant 0 : index
    %c0_14 = arith.constant 0 : index
    %29 = vector.load %arg3[%c0_13, %c0_14] : memref<32x32xbf16, #tpu.memory_space<vmem>>, vector<32x32xbf16>
    %cst_15 = arith.constant dense<0.000000e+00> : vector<8x32xf32>
    %30 = tpu.matmul %26, %29, %cst_15 {dimension_numbers = #tpu.dot_dimension_numbers<[1], [0], [0], [1], [0, 0, 1, 1], [], []>} : vector<8x32xbf16>, vector<32x32xbf16>, vector<8x32xf32> -> vector<8x32xf32>
    %c0_16 = arith.constant 0 : index
    %c0_17 = arith.constant 0 : index
    %31 = vector.load %arg4[%c0_16, %c0_17] : memref<32x32xbf16, #tpu.memory_space<vmem>>, vector<32x32xbf16>
    %cst_18 = arith.constant dense<0.000000e+00> : vector<8x32xf32>
    %32 = tpu.matmul %26, %31, %cst_18 {dimension_numbers = #tpu.dot_dimension_numbers<[1], [0], [0], [1], [0, 0, 1, 1], [], []>} : vector<8x32xbf16>, vector<32x32xbf16>, vector<8x32xf32> -> vector<8x32xf32>
    %cst_19 = arith.constant 0.353553385 : f32
    %33 = vector.broadcast %cst_19 : f32 to vector<8x32xf32>
    %34 = arith.mulf %28, %33 : vector<8x32xf32>
    %35 = arith.truncf %34 : vector<8x32xf32> to vector<8x32xbf16>
    %36 = arith.truncf %30 : vector<8x32xf32> to vector<8x32xbf16>
    %37 = arith.truncf %32 : vector<8x32xf32> to vector<8x32xbf16>
    %38 = vector.extract_strided_slice %35 {offsets = [0, 0], sizes = [8, 8], strides = [1, 1]} : vector<8x32xbf16> to vector<8x8xbf16>
    %cst_20 = arith.constant -1.000000e+30 : f32
    %39 = vector.broadcast %cst_20 : f32 to vector<8x1xf32>
    %cst_21 = arith.constant 0.000000e+00 : f32
    %40 = vector.broadcast %cst_21 : f32 to vector<8x1xf32>
    %cst_22 = arith.constant 0.000000e+00 : f32
    %41 = vector.broadcast %cst_22 : f32 to vector<8x8xf32>
    %42 = vector.extract_strided_slice %36 {offsets = [0, 0], sizes = [8, 8], strides = [1, 1]} : vector<8x32xbf16> to vector<8x8xbf16>
    %43 = vector.extract_strided_slice %37 {offsets = [0, 0], sizes = [8, 8], strides = [1, 1]} : vector<8x32xbf16> to vector<8x8xbf16>
    %44 = tpu.transpose %42, [1, 0] : vector<8x8xbf16> -> vector<8x8xbf16>
    %cst_23 = arith.constant dense<0.000000e+00> : vector<8x8xf32>
    %45 = tpu.matmul %38, %44, %cst_23 {dimension_numbers = #tpu.dot_dimension_numbers<[1], [0], [0], [1], [0, 0, 1, 1], [], []>} : vector<8x8xbf16>, vector<8x8xbf16>, vector<8x8xf32> -> vector<8x8xf32>
    %46 = tpu.iota {dimensions = array<i32: 0>} : vector<8x8xi32>
    %c0_i32 = arith.constant 0 : i32
    %47 = vector.broadcast %c0_i32 : i32 to vector<8x8xi32>
    %48 = arith.addi %47, %46 : vector<8x8xi32>
    %49 = tpu.iota {dimensions = array<i32: 1>} : vector<8x8xi32>
    %c0_i32_24 = arith.constant 0 : i32
    %50 = vector.broadcast %c0_i32_24 : i32 to vector<8x8xi32>
    %51 = arith.addi %50, %49 : vector<8x8xi32>
    %52 = arith.cmpi sgt, %51, %48 : vector<8x8xi32>
    %cst_25 = arith.constant -1.000000e+30 : f32
    %53 = vector.broadcast %cst_25 : f32 to vector<8x8xf32>
    %54 = arith.select %52, %53, %45 : vector<8x8xi1>, vector<8x8xf32>
    %cst_26 = arith.constant dense<0xFF800000> : vector<8xf32>
    %55 = vector.multi_reduction <maximumf>, %54, %cst_26 [1] : vector<8x8xf32> to vector<8xf32>
    %56 = vector.shape_cast %55 : vector<8xf32> to vector<8x1xf32>
    %57 = arith.maximumf %39, %56 : vector<8x1xf32>
    %58 = arith.subf %39, %57 : vector<8x1xf32>
    %59 = math.exp %58 : vector<8x1xf32>
    %60 = vector.broadcast %57 : vector<8x1xf32> to vector<8x8xf32>
    %61 = arith.subf %54, %60 : vector<8x8xf32>
    %62 = math.exp %61 : vector<8x8xf32>
    %63 = arith.mulf %59, %40 : vector<8x1xf32>
    %cst_27 = arith.constant dense<0.000000e+00> : vector<8xf32>
    %64 = vector.multi_reduction <add>, %62, %cst_27 [1] : vector<8x8xf32> to vector<8xf32>
    %65 = vector.shape_cast %64 : vector<8xf32> to vector<8x1xf32>
    %66 = arith.addf %63, %65 : vector<8x1xf32>
    %67 = vector.broadcast %59 : vector<8x1xf32> to vector<8x8xf32>
    %68 = arith.mulf %67, %41 : vector<8x8xf32>
    %69 = arith.truncf %62 : vector<8x8xf32> to vector<8x8xbf16>
    %cst_28 = arith.constant dense<0.000000e+00> : vector<8x8xf32>
    %70 = tpu.matmul %69, %43, %cst_28 {dimension_numbers = #tpu.dot_dimension_numbers<[1], [0], [0], [1], [0, 0, 1, 1], [], []>} : vector<8x8xbf16>, vector<8x8xbf16>, vector<8x8xf32> -> vector<8x8xf32>
    %71 = arith.addf %68, %70 : vector<8x8xf32>
    %72 = tpu.reciprocal %66 {approx = true} : vector<8x1xf32> -> vector<8x1xf32>
    %73 = vector.broadcast %72 : vector<8x1xf32> to vector<8x8xf32>
    %74 = arith.mulf %71, %73 : vector<8x8xf32>
    %c0_29 = arith.constant 0 : index
    %c0_30 = arith.constant 0 : index
    %75 = vector.load %arg16[%c0_29, %c0_30] : memref<8x32xf32, #tpu.memory_space<vmem>>, vector<8x8xf32>
    tpu.vector_store %arg16[%c0_29, %c0_30], %74 {strides = array<i32>} : memref<8x32xf32, #tpu.memory_space<vmem>>, vector<8x8xf32>,
    %76 = vector.extract_strided_slice %35 {offsets = [0, 8], sizes = [8, 8], strides = [1, 1]} : vector<8x32xbf16> to vector<8x8xbf16>
    %cst_31 = arith.constant -1.000000e+30 : f32
    %77 = vector.broadcast %cst_31 : f32 to vector<8x1xf32>
    %cst_32 = arith.constant 0.000000e+00 : f32
    %78 = vector.broadcast %cst_32 : f32 to vector<8x1xf32>
    %cst_33 = arith.constant 0.000000e+00 : f32
    %79 = vector.broadcast %cst_33 : f32 to vector<8x8xf32>
    %80 = vector.extract_strided_slice %36 {offsets = [0, 8], sizes = [8, 8], strides = [1, 1]} : vector<8x32xbf16> to vector<8x8xbf16>
    %81 = vector.extract_strided_slice %37 {offsets = [0, 8], sizes = [8, 8], strides = [1, 1]} : vector<8x32xbf16> to vector<8x8xbf16>
    %82 = tpu.transpose %80, [1, 0] : vector<8x8xbf16> -> vector<8x8xbf16>
    %cst_34 = arith.constant dense<0.000000e+00> : vector<8x8xf32>
    %83 = tpu.matmul %76, %82, %cst_34 {dimension_numbers = #tpu.dot_dimension_numbers<[1], [0], [0], [1], [0, 0, 1, 1], [], []>} : vector<8x8xbf16>, vector<8x8xbf16>, vector<8x8xf32> -> vector<8x8xf32>
    %84 = tpu.iota {dimensions = array<i32: 0>} : vector<8x8xi32>
    %c0_i32_35 = arith.constant 0 : i32
    %85 = vector.broadcast %c0_i32_35 : i32 to vector<8x8xi32>
    %86 = arith.addi %85, %84 : vector<8x8xi32>
    %87 = tpu.iota {dimensions = array<i32: 1>} : vector<8x8xi32>
    %c0_i32_36 = arith.constant 0 : i32
    %88 = vector.broadcast %c0_i32_36 : i32 to vector<8x8xi32>
    %89 = arith.addi %88, %87 : vector<8x8xi32>
    %90 = arith.cmpi sgt, %89, %86 : vector<8x8xi32>
    %cst_37 = arith.constant -1.000000e+30 : f32
    %91 = vector.broadcast %cst_37 : f32 to vector<8x8xf32>
    %92 = arith.select %90, %91, %83 : vector<8x8xi1>, vector<8x8xf32>
    %cst_38 = arith.constant dense<0xFF800000> : vector<8xf32>
    %93 = vector.multi_reduction <maximumf>, %92, %cst_38 [1] : vector<8x8xf32> to vector<8xf32>
    %94 = vector.shape_cast %93 : vector<8xf32> to vector<8x1xf32>
    %95 = arith.maximumf %77, %94 : vector<8x1xf32>
    %96 = arith.subf %77, %95 : vector<8x1xf32>
    %97 = math.exp %96 : vector<8x1xf32>
    %98 = vector.broadcast %95 : vector<8x1xf32> to vector<8x8xf32>
    %99 = arith.subf %92, %98 : vector<8x8xf32>
    %100 = math.exp %99 : vector<8x8xf32>
    %101 = arith.mulf %97, %78 : vector<8x1xf32>
    %cst_39 = arith.constant dense<0.000000e+00> : vector<8xf32>
    %102 = vector.multi_reduction <add>, %100, %cst_39 [1] : vector<8x8xf32> to vector<8xf32>
    %103 = vector.shape_cast %102 : vector<8xf32> to vector<8x1xf32>
    %104 = arith.addf %101, %103 : vector<8x1xf32>
    %105 = vector.broadcast %97 : vector<8x1xf32> to vector<8x8xf32>
    %106 = arith.mulf %105, %79 : vector<8x8xf32>
    %107 = arith.truncf %100 : vector<8x8xf32> to vector<8x8xbf16>
    %cst_40 = arith.constant dense<0.000000e+00> : vector<8x8xf32>
    %108 = tpu.matmul %107, %81, %cst_40 {dimension_numbers = #tpu.dot_dimension_numbers<[1], [0], [0], [1], [0, 0, 1, 1], [], []>} : vector<8x8xbf16>, vector<8x8xbf16>, vector<8x8xf32> -> vector<8x8xf32>
    %109 = arith.addf %106, %108 : vector<8x8xf32>
    %110 = tpu.reciprocal %104 {approx = true} : vector<8x1xf32> -> vector<8x1xf32>
    %111 = vector.broadcast %110 : vector<8x1xf32> to vector<8x8xf32>
    %112 = arith.mulf %109, %111 : vector<8x8xf32>
    %c0_41 = arith.constant 0 : index
    %c8 = arith.constant 8 : index
    %113 = vector.load %arg16[%c0_41, %c8] : memref<8x32xf32, #tpu.memory_space<vmem>>, vector<8x8xf32>
    tpu.vector_store %arg16[%c0_41, %c8], %112 {strides = array<i32>} : memref<8x32xf32, #tpu.memory_space<vmem>>, vector<8x8xf32>,
    %114 = vector.extract_strided_slice %35 {offsets = [0, 16], sizes = [8, 8], strides = [1, 1]} : vector<8x32xbf16> to vector<8x8xbf16>
    %cst_42 = arith.constant -1.000000e+30 : f32
    %115 = vector.broadcast %cst_42 : f32 to vector<8x1xf32>
    %cst_43 = arith.constant 0.000000e+00 : f32
    %116 = vector.broadcast %cst_43 : f32 to vector<8x1xf32>
    %cst_44 = arith.constant 0.000000e+00 : f32
    %117 = vector.broadcast %cst_44 : f32 to vector<8x8xf32>
    %118 = vector.extract_strided_slice %36 {offsets = [0, 16], sizes = [8, 8], strides = [1, 1]} : vector<8x32xbf16> to vector<8x8xbf16>
    %119 = vector.extract_strided_slice %37 {offsets = [0, 16], sizes = [8, 8], strides = [1, 1]} : vector<8x32xbf16> to vector<8x8xbf16>
    %120 = tpu.transpose %118, [1, 0] : vector<8x8xbf16> -> vector<8x8xbf16>
    %cst_45 = arith.constant dense<0.000000e+00> : vector<8x8xf32>
    %121 = tpu.matmul %114, %120, %cst_45 {dimension_numbers = #tpu.dot_dimension_numbers<[1], [0], [0], [1], [0, 0, 1, 1], [], []>} : vector<8x8xbf16>, vector<8x8xbf16>, vector<8x8xf32> -> vector<8x8xf32>
    %122 = tpu.iota {dimensions = array<i32: 0>} : vector<8x8xi32>
    %c0_i32_46 = arith.constant 0 : i32
    %123 = vector.broadcast %c0_i32_46 : i32 to vector<8x8xi32>
    %124 = arith.addi %123, %122 : vector<8x8xi32>
    %125 = tpu.iota {dimensions = array<i32: 1>} : vector<8x8xi32>
    %c0_i32_47 = arith.constant 0 : i32
    %126 = vector.broadcast %c0_i32_47 : i32 to vector<8x8xi32>
    %127 = arith.addi %126, %125 : vector<8x8xi32>
    %128 = arith.cmpi sgt, %127, %124 : vector<8x8xi32>
    %cst_48 = arith.constant -1.000000e+30 : f32
    %129 = vector.broadcast %cst_48 : f32 to vector<8x8xf32>
    %130 = arith.select %128, %129, %121 : vector<8x8xi1>, vector<8x8xf32>
    %cst_49 = arith.constant dense<0xFF800000> : vector<8xf32>
    %131 = vector.multi_reduction <maximumf>, %130, %cst_49 [1] : vector<8x8xf32> to vector<8xf32>
    %132 = vector.shape_cast %131 : vector<8xf32> to vector<8x1xf32>
    %133 = arith.maximumf %115, %132 : vector<8x1xf32>
    %134 = arith.subf %115, %133 : vector<8x1xf32>
    %135 = math.exp %134 : vector<8x1xf32>
    %136 = vector.broadcast %133 : vector<8x1xf32> to vector<8x8xf32>
    %137 = arith.subf %130, %136 : vector<8x8xf32>
    %138 = math.exp %137 : vector<8x8xf32>
    %139 = arith.mulf %135, %116 : vector<8x1xf32>
    %cst_50 = arith.constant dense<0.000000e+00> : vector<8xf32>
    %140 = vector.multi_reduction <add>, %138, %cst_50 [1] : vector<8x8xf32> to vector<8xf32>
    %141 = vector.shape_cast %140 : vector<8xf32> to vector<8x1xf32>
    %142 = arith.addf %139, %141 : vector<8x1xf32>
    %143 = vector.broadcast %135 : vector<8x1xf32> to vector<8x8xf32>
    %144 = arith.mulf %143, %117 : vector<8x8xf32>
    %145 = arith.truncf %138 : vector<8x8xf32> to vector<8x8xbf16>
    %cst_51 = arith.constant dense<0.000000e+00> : vector<8x8xf32>
    %146 = tpu.matmul %145, %119, %cst_51 {dimension_numbers = #tpu.dot_dimension_numbers<[1], [0], [0], [1], [0, 0, 1, 1], [], []>} : vector<8x8xbf16>, vector<8x8xbf16>, vector<8x8xf32> -> vector<8x8xf32>
    %147 = arith.addf %144, %146 : vector<8x8xf32>
    %148 = tpu.reciprocal %142 {approx = true} : vector<8x1xf32> -> vector<8x1xf32>
    %149 = vector.broadcast %148 : vector<8x1xf32> to vector<8x8xf32>
    %150 = arith.mulf %147, %149 : vector<8x8xf32>
    %c0_52 = arith.constant 0 : index
    %c16 = arith.constant 16 : index
    %151 = vector.load %arg16[%c0_52, %c16] : memref<8x32xf32, #tpu.memory_space<vmem>>, vector<8x8xf32>
    tpu.vector_store %arg16[%c0_52, %c16], %150 {strides = array<i32>} : memref<8x32xf32, #tpu.memory_space<vmem>>, vector<8x8xf32>,
    %152 = vector.extract_strided_slice %35 {offsets = [0, 24], sizes = [8, 8], strides = [1, 1]} : vector<8x32xbf16> to vector<8x8xbf16>
    %cst_53 = arith.constant -1.000000e+30 : f32
    %153 = vector.broadcast %cst_53 : f32 to vector<8x1xf32>
    %cst_54 = arith.constant 0.000000e+00 : f32
    %154 = vector.broadcast %cst_54 : f32 to vector<8x1xf32>
    %cst_55 = arith.constant 0.000000e+00 : f32
    %155 = vector.broadcast %cst_55 : f32 to vector<8x8xf32>
    %156 = vector.extract_strided_slice %36 {offsets = [0, 24], sizes = [8, 8], strides = [1, 1]} : vector<8x32xbf16> to vector<8x8xbf16>
    %157 = vector.extract_strided_slice %37 {offsets = [0, 24], sizes = [8, 8], strides = [1, 1]} : vector<8x32xbf16> to vector<8x8xbf16>
    %158 = tpu.transpose %156, [1, 0] : vector<8x8xbf16> -> vector<8x8xbf16>
    %cst_56 = arith.constant dense<0.000000e+00> : vector<8x8xf32>
    %159 = tpu.matmul %152, %158, %cst_56 {dimension_numbers = #tpu.dot_dimension_numbers<[1], [0], [0], [1], [0, 0, 1, 1], [], []>} : vector<8x8xbf16>, vector<8x8xbf16>, vector<8x8xf32> -> vector<8x8xf32>
    %160 = tpu.iota {dimensions = array<i32: 0>} : vector<8x8xi32>
    %c0_i32_57 = arith.constant 0 : i32
    %161 = vector.broadcast %c0_i32_57 : i32 to vector<8x8xi32>
    %162 = arith.addi %161, %160 : vector<8x8xi32>
    %163 = tpu.iota {dimensions = array<i32: 1>} : vector<8x8xi32>
    %c0_i32_58 = arith.constant 0 : i32
    %164 = vector.broadcast %c0_i32_58 : i32 to vector<8x8xi32>
    %165 = arith.addi %164, %163 : vector<8x8xi32>
    %166 = arith.cmpi sgt, %165, %162 : vector<8x8xi32>
    %cst_59 = arith.constant -1.000000e+30 : f32
    %167 = vector.broadcast %cst_59 : f32 to vector<8x8xf32>
    %168 = arith.select %166, %167, %159 : vector<8x8xi1>, vector<8x8xf32>
    %cst_60 = arith.constant dense<0xFF800000> : vector<8xf32>
    %169 = vector.multi_reduction <maximumf>, %168, %cst_60 [1] : vector<8x8xf32> to vector<8xf32>
    %170 = vector.shape_cast %169 : vector<8xf32> to vector<8x1xf32>
    %171 = arith.maximumf %153, %170 : vector<8x1xf32>
    %172 = arith.subf %153, %171 : vector<8x1xf32>
    %173 = math.exp %172 : vector<8x1xf32>
    %174 = vector.broadcast %171 : vector<8x1xf32> to vector<8x8xf32>
    %175 = arith.subf %168, %174 : vector<8x8xf32>
    %176 = math.exp %175 : vector<8x8xf32>
    %177 = arith.mulf %173, %154 : vector<8x1xf32>
    %cst_61 = arith.constant dense<0.000000e+00> : vector<8xf32>
    %178 = vector.multi_reduction <add>, %176, %cst_61 [1] : vector<8x8xf32> to vector<8xf32>
    %179 = vector.shape_cast %178 : vector<8xf32> to vector<8x1xf32>
    %180 = arith.addf %177, %179 : vector<8x1xf32>
    %181 = vector.broadcast %173 : vector<8x1xf32> to vector<8x8xf32>
    %182 = arith.mulf %181, %155 : vector<8x8xf32>
    %183 = arith.truncf %176 : vector<8x8xf32> to vector<8x8xbf16>
    %cst_62 = arith.constant dense<0.000000e+00> : vector<8x8xf32>
    %184 = tpu.matmul %183, %157, %cst_62 {dimension_numbers = #tpu.dot_dimension_numbers<[1], [0], [0], [1], [0, 0, 1, 1], [], []>} : vector<8x8xbf16>, vector<8x8xbf16>, vector<8x8xf32> -> vector<8x8xf32>
    %185 = arith.addf %182, %184 : vector<8x8xf32>
    %186 = tpu.reciprocal %180 {approx = true} : vector<8x1xf32> -> vector<8x1xf32>
    %187 = vector.broadcast %186 : vector<8x1xf32> to vector<8x8xf32>
    %188 = arith.mulf %185, %187 : vector<8x8xf32>
    %c0_63 = arith.constant 0 : index
    %c24 = arith.constant 24 : index
    %189 = vector.load %arg16[%c0_63, %c24] : memref<8x32xf32, #tpu.memory_space<vmem>>, vector<8x8xf32>
    tpu.vector_store %arg16[%c0_63, %c24], %188 {strides = array<i32>} : memref<8x32xf32, #tpu.memory_space<vmem>>, vector<8x8xf32>,
    %c0_64 = arith.constant 0 : index
    %c0_65 = arith.constant 0 : index
    %190 = vector.load %arg16[%c0_64, %c0_65] : memref<8x32xf32, #tpu.memory_space<vmem>>, vector<8x32xf32>
    %191 = arith.truncf %190 : vector<8x32xf32> to vector<8x32xbf16>
    %c0_66 = arith.constant 0 : index
    %c0_67 = arith.constant 0 : index
    %192 = vector.load %arg5[%c0_66, %c0_67] : memref<32x32xbf16, #tpu.memory_space<vmem>>, vector<32x32xbf16>
    %cst_68 = arith.constant dense<0.000000e+00> : vector<8x32xf32>
    %193 = tpu.matmul %191, %192, %cst_68 {dimension_numbers = #tpu.dot_dimension_numbers<[1], [0], [0], [1], [0, 0, 1, 1], [], []>} : vector<8x32xbf16>, vector<32x32xbf16>, vector<8x32xf32> -> vector<8x32xf32>
    %c0_69 = arith.constant 0 : index
    %c0_70 = arith.constant 0 : index
    %194 = vector.load %arg6[%c0_69, %c0_70] : memref<1x32xf32, #tpu.memory_space<vmem>>, vector<1x32xf32>
    %195 = vector.broadcast %194 : vector<1x32xf32> to vector<8x32xf32>
    %196 = arith.addf %193, %195 : vector<8x32xf32>
    %197 = arith.addf %1, %196 : vector<8x32xf32>
    %c0_71 = arith.constant 0 : index
    %c0_72 = arith.constant 0 : index
    %198 = vector.load %arg9[%c0_71, %c0_72] : memref<1x32xf32, #tpu.memory_space<vmem>>, vector<1x32xf32>
    %c0_73 = arith.constant 0 : index
    %c0_74 = arith.constant 0 : index
    %199 = vector.load %arg10[%c0_73, %c0_74] : memref<1x32xf32, #tpu.memory_space<vmem>>, vector<1x32xf32>
    %cst_75 = arith.constant dense<0.000000e+00> : vector<8xf32>
    %200 = vector.multi_reduction <add>, %197, %cst_75 [1] : vector<8x32xf32> to vector<8xf32>
    %201 = vector.shape_cast %200 : vector<8xf32> to vector<8x1xf32>
    %cst_76 = arith.constant 3.200000e+01 : f32
    %202 = vector.broadcast %cst_76 : f32 to vector<8x1xf32>
    %203 = arith.divf %201, %202 : vector<8x1xf32>
    %204 = vector.broadcast %203 : vector<8x1xf32> to vector<8x32xf32>
    %205 = arith.subf %197, %204 : vector<8x32xf32>
    %206 = arith.mulf %205, %205 : vector<8x32xf32>
    %cst_77 = arith.constant dense<0.000000e+00> : vector<8xf32>
    %207 = vector.multi_reduction <add>, %206, %cst_77 [1] : vector<8x32xf32> to vector<8xf32>
    %208 = vector.shape_cast %207 : vector<8xf32> to vector<8x1xf32>
    %cst_78 = arith.constant 3.200000e+01 : f32
    %209 = vector.broadcast %cst_78 : f32 to vector<8x1xf32>
    %210 = arith.divf %208, %209 : vector<8x1xf32>
    %211 = vector.broadcast %203 : vector<8x1xf32> to vector<8x32xf32>
    %212 = arith.subf %197, %211 : vector<8x32xf32>
    %cst_79 = arith.constant 9.99999974E-6 : f32
    %213 = vector.broadcast %cst_79 : f32 to vector<8x1xf32>
    %214 = arith.addf %210, %213 : vector<8x1xf32>
    %215 = math.rsqrt %214 : vector<8x1xf32>
    %216 = vector.broadcast %215 : vector<8x1xf32> to vector<8x32xf32>
    %217 = arith.mulf %212, %216 : vector<8x32xf32>
    %218 = vector.broadcast %198 : vector<1x32xf32> to vector<8x32xf32>
    %219 = arith.mulf %218, %217 : vector<8x32xf32>
    %220 = vector.broadcast %199 : vector<1x32xf32> to vector<8x32xf32>
    %221 = arith.addf %219, %220 : vector<8x32xf32>
    %222 = arith.truncf %221 : vector<8x32xf32> to vector<8x32xbf16>
    %cst_80 = arith.constant 0.000000e+00 : f32
    %223 = vector.broadcast %cst_80 : f32 to vector<8x32xf32>
    %c0_81 = arith.constant 0 : index
    %c0_82 = arith.constant 0 : index
    %224 = vector.load %arg11[%c0_81, %c0_82] : memref<32x128xbf16, #tpu.memory_space<vmem>>, vector<32x128xbf16>
    %c0_83 = arith.constant 0 : index
    %c0_84 = arith.constant 0 : index
    %225 = vector.load %arg12[%c0_83, %c0_84] : memref<1x128xf32, #tpu.memory_space<vmem>>, vector<1x128xf32>
    %cst_85 = arith.constant dense<0.000000e+00> : vector<8x128xf32>
    %226 = tpu.matmul %222, %224, %cst_85 {dimension_numbers = #tpu.dot_dimension_numbers<[1], [0], [0], [1], [0, 0, 1, 1], [], []>} : vector<8x32xbf16>, vector<32x128xbf16>, vector<8x128xf32> -> vector<8x128xf32>
    %227 = vector.broadcast %225 : vector<1x128xf32> to vector<8x128xf32>
    %228 = arith.addf %226, %227 : vector<8x128xf32>
    %cst_86 = arith.constant 5.000000e-01 : f32
    %229 = vector.broadcast %cst_86 : f32 to vector<8x128xf32>
    %230 = arith.mulf %229, %228 : vector<8x128xf32>
    %231 = arith.mulf %228, %228 : vector<8x128xf32>
    %232 = arith.mulf %231, %228 : vector<8x128xf32>
    %cst_87 = arith.constant 4.471500e-02 : f32
    %233 = vector.broadcast %cst_87 : f32 to vector<8x128xf32>
    %234 = arith.mulf %233, %232 : vector<8x128xf32>
    %235 = arith.addf %228, %234 : vector<8x128xf32>
    %cst_88 = arith.constant 0.797884583 : f32
    %236 = vector.broadcast %cst_88 : f32 to vector<8x128xf32>
    %237 = arith.mulf %236, %235 : vector<8x128xf32>
    %238 = math.tanh %237 : vector<8x128xf32>
    %cst_89 = arith.constant 1.000000e+00 : f32
    %239 = vector.broadcast %cst_89 : f32 to vector<8x128xf32>
    %240 = arith.addf %239, %238 : vector<8x128xf32>
    %241 = arith.mulf %230, %240 : vector<8x128xf32>
    %242 = arith.truncf %241 : vector<8x128xf32> to vector<8x128xbf16>
    %c0_90 = arith.constant 0 : index
    %c0_91 = arith.constant 0 : index
    %243 = vector.load %arg13[%c0_90, %c0_91] : memref<128x32xbf16, #tpu.memory_space<vmem>>, vector<128x32xbf16>
    %cst_92 = arith.constant dense<0.000000e+00> : vector<8x32xf32>
    %244 = tpu.matmul %242, %243, %cst_92 {dimension_numbers = #tpu.dot_dimension_numbers<[1], [0], [0], [1], [0, 0, 1, 1], [], []>} : vector<8x128xbf16>, vector<128x32xbf16>, vector<8x32xf32> -> vector<8x32xf32>
    %245 = arith.addf %223, %244 : vector<8x32xf32>
    %c0_93 = arith.constant 0 : index
    %c0_94 = arith.constant 0 : index
    %246 = vector.load %arg14[%c0_93, %c0_94] : memref<1x32xf32, #tpu.memory_space<vmem>>, vector<1x32xf32>
    %247 = vector.broadcast %246 : vector<1x32xf32> to vector<8x32xf32>
    %248 = arith.addf %245, %247 : vector<8x32xf32>
    %249 = arith.addf %197, %248 : vector<8x32xf32>
    %c0_95 = arith.constant 0 : index
    %c0_96 = arith.constant 0 : index
    %c0_97 = arith.constant 0 : index
    %250 = vector.load %arg15[%c0_95, %c0_96, %c0_97] : memref<1x8x32xf32, #tpu.memory_space<vmem>>, vector<1x8x32xf32>
    %251 = vector.shape_cast %250 : vector<1x8x32xf32> to vector<8x32xf32>
    %252 = vector.shape_cast %249 : vector<8x32xf32> to vector<1x8x32xf32>
    tpu.vector_store %arg15[%c0_95, %c0_96, %c0_97], %252 {strides = array<i32>} : memref<1x8x32xf32, #tpu.memory_space<vmem>>, vector<1x8x32xf32>,
    return
  }
  func.func @transform_0(%arg0: i32) -> (i32, i32, i32) {
    %c0_i32 = arith.constant 0 : i32
    %c0_i32_0 = arith.constant 0 : i32
    %c0_i32_1 = arith.constant 0 : i32
    return %arg0, %c0_i32, %c0_i32_0 : i32, i32, i32
  }
  func.func @transform_1(%arg0: i32) -> (i32, i32) {
    %c0_i32 = arith.constant 0 : i32
    %c0_i32_0 = arith.constant 0 : i32
    %c0_i32_1 = arith.constant 0 : i32
    return %c0_i32, %c0_i32_0 : i32, i32
  }
  func.func @transform_2(%arg0: i32) -> (i32, i32) {
    %c0_i32 = arith.constant 0 : i32
    %c0_i32_0 = arith.constant 0 : i32
    %c0_i32_1 = arith.constant 0 : i32
    return %c0_i32, %c0_i32_0 : i32, i32
  }
  func.func @transform_3(%arg0: i32) -> (i32, i32) {
    %c0_i32 = arith.constant 0 : i32
    %c0_i32_0 = arith.constant 0 : i32
    %c0_i32_1 = arith.constant 0 : i32
    return %c0_i32, %c0_i32_0 : i32, i32
  }
  func.func @transform_4(%arg0: i32) -> (i32, i32) {
    %c0_i32 = arith.constant 0 : i32
    %c0_i32_0 = arith.constant 0 : i32
    %c0_i32_1 = arith.constant 0 : i32
    return %c0_i32, %c0_i32_0 : i32, i32
  }
  func.func @transform_5(%arg0: i32) -> (i32, i32) {
    %c0_i32 = arith.constant 0 : i32
    %c0_i32_0 = arith.constant 0 : i32
    %c0_i32_1 = arith.constant 0 : i32
    return %c0_i32, %c0_i32_0 : i32, i32
  }
  func.func @transform_6(%arg0: i32) -> (i32, i32) {
    %c0_i32 = arith.constant 0 : i32
    %c0_i32_0 = arith.constant 0 : i32
    %c0_i32_1 = arith.constant 0 : i32
    return %c0_i32, %c0_i32_0 : i32, i32
  }
  func.func @transform_7(%arg0: i32) -> (i32, i32) {
    %c0_i32 = arith.constant 0 : i32
    %c0_i32_0 = arith.constant 0 : i32
    %c0_i32_1 = arith.constant 0 : i32
    return %c0_i32, %c0_i32_0 : i32, i32
  }
  func.func @transform_8(%arg0: i32) -> (i32, i32) {
    %c0_i32 = arith.constant 0 : i32
    %c0_i32_0 = arith.constant 0 : i32
    %c0_i32_1 = arith.constant 0 : i32
    return %c0_i32, %c0_i32_0 : i32, i32
  }
  func.func @transform_9(%arg0: i32) -> (i32, i32) {
    %c0_i32 = arith.constant 0 : i32
    %c0_i32_0 = arith.constant 0 : i32
    %c0_i32_1 = arith.constant 0 : i32
    return %c0_i32, %c0_i32_0 : i32, i32
  }
  func.func @transform_10(%arg0: i32) -> (i32, i32) {
    %c0_i32 = arith.constant 0 : i32
    %c0_i32_0 = arith.constant 0 : i32
    %c0_i32_1 = arith.constant 0 : i32
    return %c0_i32, %c0_i32_0 : i32, i32
  }
  func.func @transform_11(%arg0: i32) -> (i32, i32) {
    %c0_i32 = arith.constant 0 : i32
    %c0_i32_0 = arith.constant 0 : i32
    %c0_i32_1 = arith.constant 0 : i32
    return %c0_i32, %c0_i32_0 : i32, i32
  }
  func.func @transform_12(%arg0: i32) -> (i32, i32) {
    %c0_i32 = arith.constant 0 : i32
    %c0_i32_0 = arith.constant 0 : i32
    %c0_i32_1 = arith.constant 0 : i32
    return %c0_i32, %c0_i32_0 : i32, i32
  }
  func.func @transform_13(%arg0: i32) -> (i32, i32) {
    %c0_i32 = arith.constant 0 : i32
    %c0_i32_0 = arith.constant 0 : i32
    %c0_i32_1 = arith.constant 0 : i32
    return %c0_i32, %c0_i32_0 : i32, i32
  }
  func.func @transform_14(%arg0: i32) -> (i32, i32, i32) {
    %c0_i32 = arith.constant 0 : i32
    %c0_i32_0 = arith.constant 0 : i32
    %c0_i32_1 = arith.constant 0 : i32
    return %arg0, %c0_i32, %c0_i32_0 : i32, i32, i32
  }
}

</mosaic_0001>

<llo_original>
// kernel: tpu_custom_call.1
$region0: #{tpu_custom_call.1}
  #allocation0 [shape = 'u32[]', space=smem, size = 0x4, offset = 0x4, fixed_abs, tag = 'smem constant byte address 0x4 - core index']
  #allocation1 [shape = 'u32[144,128]{1,0:T(1,128)}', space=vmem, size = 0x12000, scoped, tag = 'internal scratch']
  #allocation2 [shape = 'f32[8,32]{1,0:T(8,128)}', space=vmem, size = 0x1000, scoped, tag = 'scratch operand']
  %s0 = inlined_call_operand.vmem [shape: f32[2,8,32], index: 0, kind: input, shape index: {}]
  %s1 = inlined_call_operand.vmem [shape: bf16[32,32], index: 1, kind: input, shape index: {}]
  %s2 = inlined_call_operand.vmem [shape: bf16[32,32], index: 2, kind: input, shape index: {}]
  %s3 = inlined_call_operand.vmem [shape: bf16[32,32], index: 3, kind: input, shape index: {}]
  %s4 = inlined_call_operand.vmem [shape: bf16[32,32], index: 4, kind: input, shape index: {}]
  %s5 = inlined_call_operand.vmem [shape: f32[1,32], index: 5, kind: input, shape index: {}]
  %s6 = inlined_call_operand.vmem [shape: f32[1,32], index: 6, kind: input, shape index: {}]
  %s7 = inlined_call_operand.hbm [shape: f32[1,32], index: 7, kind: input, shape index: {}]
  %s8 = inlined_call_operand.hbm [shape: f32[1,32], index: 8, kind: input, shape index: {}]
  %s9 = inlined_call_operand.hbm [shape: f32[1,32], index: 9, kind: input, shape index: {}]
  %s10 = inlined_call_operand.vmem [shape: bf16[32,128], index: 10, kind: input, shape index: {}]
  %s11 = inlined_call_operand.vmem [shape: f32[1,128], index: 11, kind: input, shape index: {}]
  %s12 = inlined_call_operand.vmem [shape: bf16[128,32], index: 12, kind: input, shape index: {}]
  %s13 = inlined_call_operand.vmem [shape: f32[1,32], index: 13, kind: input, shape index: {}]
  %s14 = inlined_call_operand.hbm [shape: f32[2,8,32], index: 14, kind: output, shape index: {}]
  %s15 = sld [smem:[#allocation0]]
  $region101: #{tpu_custom_call.1} parent=0
    _
  %s17 = ssub.s32 1, %s15
  %s18 = scalar_select 0, %s17, %s15
  $region1: #{tpu_custom_call.1} parent=0
    #allocation3 [shape = 'u8[512]{0}', space=vmem, size = 0x400, scoped, tag = 'input window, operand 7, single buffered']
    #allocation4 [shape = 's32[2]{0}', space=sflag, size = 0x8, scoped, tag = 'scoped memory for tpu_custom_call.1']
    #allocation5 [shape = 's32[2]{0}', space=sflag, size = 0x8, scoped, tag = 'scoped memory for tpu_custom_call.1']
    #allocation6 [shape = 'u8[512]{0}', space=vmem, size = 0x400, scoped, tag = 'input window, operand 8, single buffered']
    #allocation7 [shape = 's32[1]{0}', space=sflag, size = 0x4, scoped, tag = 'scoped memory for tpu_custom_call.1']
    #allocation8 [shape = 'u8[512]{0}', space=vmem, size = 0x400, scoped, tag = 'input window, operand 9, single buffered']
    #allocation9 [shape = 'u8[8192]{0}', space=vmem, size = 0x2000, scoped, tag = 'output window, operand 0']
    %19 = vsyncpa [#allocation4], 0
    %20 = vsyncpa [#allocation7], 0
    %21 = vsyncpa [#allocation5], 0
    %s22 = scalar_lea.sflag [#allocation5], 1
    %23 = vsyncpa %s22, 0
    loop: start=0, step=1, limit=4
    $region2: #{tpu_custom_call.1} parent=1 // loop_pre_header
      _
    $region3: #{tpu_custom_call.1} parent=1 // loop_header
      %s25 = sphi 0, %s29
      %p26 = scmp.ge.s32.totalorder %s25, 4
      %s35 = sphi 0, %s37
      %s38 = sphi 0, %s35
      %s39 = sphi 0, %s38
      %s55 = sphi 0, %s39
      %s59 = sphi 0, %s59
      %s61 = sphi 0, %s59
      %s62 = sphi 0, %s61
      %s76 = sphi 0, %s62
      %s80 = sphi 0, %s80
      %s82 = sphi 0, %s80
      %s83 = sphi 0, %s82
      %s97 = sphi 0, %s83
      %s101 = sphi 0, %s101
      %s103 = sphi 0, %s101
      %s104 = sphi 0, %s103
      %s118 = sphi 0, %s104
      %s122 = sphi 0, %s122
      %s124 = sphi 0, %s122
      %s125 = sphi 0, %s124
      %s139 = sphi 0, %s125
      %s143 = sphi 0, %s143
      %s145 = sphi 0, %s143
      %s146 = sphi 0, %s145
      %s160 = sphi 0, %s146
      %s164 = sphi 0, %s164
      %s166 = sphi 0, %s164
      %s167 = sphi 0, %s166
      %s181 = sphi 0, %s167
      %s185 = sphi 0, %s185
      %s187 = sphi 0, %s185
      %s188 = sphi 0, %s187
      %s202 = sphi 0, %s188
      %s206 = sphi 0, %s206
      %s208 = sphi 0, %s206
      %s209 = sphi 0, %s208
      %s223 = sphi 0, %s209
      %s227 = sphi 0, %s227
      %s229 = sphi 0, %s227
      %s230 = sphi 0, %s229
      %s244 = sphi 0, %s230
      %s248 = sphi 0, %s248
      %s250 = sphi 0, %s248
      %s251 = sphi 0, %s250
      %s265 = sphi 0, %s251
      %s269 = sphi 0, %s269
      %s271 = sphi 0, %s269
      %s272 = sphi 0, %s271
      %s286 = sphi 0, %s272
      %s290 = sphi 0, %s290
      %s292 = sphi 0, %s290
      %s293 = sphi 0, %s292
      %s307 = sphi 0, %s293
      %s311 = sphi 0, %s311
      %s313 = sphi 0, %s311
      %s314 = sphi 0, %s313
      %s328 = sphi 0, %s314
      %s334 = sphi 0, %s336
      %s337 = sphi 0, %s334
      %s338 = sphi 0, %s337
      %s354 = sphi 0, %s338
    $region4: #{tpu_custom_call.1} parent=1 // loop_header_branch
      %28 = sbr.rel (%p26) target = $region8
    $region5: #{tpu_custom_call.1} parent=1 // loop_body
      %s30 = ssub.s32 %s25, 1
      %s31 = ssub.s32 %s25, 2
      %s32 = sadd.s32 %s25, 1
      %s33 = ssub.s32 %s25, %s32
      %p34 = scmp.eq.s32.totalorder %s33, 0
      %s36 = sadd.s32 %s35, 1
      %s37 = scalar_select %p34, %s35, %s36
      %p40 = pneg %p34
      %p41 = scmp.eq.s32.totalorder %s25, 1
      %p42 = por %p40, %p41
      %p43 = scmp.ne.s32.totalorder %s35, %s38
      %p44 = scmp.eq.s32.totalorder %s25, 0
      %p45 = por %p43, %p44
      %p46 = scmp.ne.s32.totalorder %s35, %s38
      %p47 = scmp.eq.s32.totalorder %s30, 1
      %p48 = por %p46, %p47
      %p49 = scmp.ne.s32.totalorder %s38, %s39
      %p50 = scmp.eq.s32.totalorder %s30, 0
      %p51 = por %p49, %p50
      %p52 = scmp.ne.s32.totalorder %s38, %s39
      %p53 = scmp.eq.s32.totalorder %s31, 1
      %p54 = por %p52, %p53
      %p56 = scmp.ne.s32.totalorder %s39, %s55
      %p57 = scmp.eq.s32.totalorder %s31, 0
      %p58 = por %p56, %p57
      %s60 = sadd.s32 %s59, 1
      %p63 = scmp.eq.s32.totalorder %s25, 1
      %p64 = scmp.ne.s32.totalorder %s59, %s61
      %p65 = scmp.eq.s32.totalorder %s25, 0
      %p66 = por %p64, %p65
      %p67 = scmp.ne.s32.totalorder %s59, %s61
      %p68 = scmp.eq.s32.totalorder %s30, 1
      %p69 = por %p67, %p68
      %p70 = scmp.ne.s32.totalorder %s61, %s62
      %p71 = scmp.eq.s32.totalorder %s30, 0
      %p72 = por %p70, %p71
      %p73 = scmp.ne.s32.totalorder %s61, %s62
      %p74 = scmp.eq.s32.totalorder %s31, 1
      %p75 = por %p73, %p74
      %p77 = scmp.ne.s32.totalorder %s62, %s76
      %p78 = scmp.eq.s32.totalorder %s31, 0
      %p79 = por %p77, %p78
      %s81 = sadd.s32 %s80, 1
      %p84 = scmp.eq.s32.totalorder %s25, 1
      %p85 = scmp.ne.s32.totalorder %s80, %s82
      %p86 = scmp.eq.s32.totalorder %s25, 0
      %p87 = por %p85, %p86
      %p88 = scmp.ne.s32.totalorder %s80, %s82
      %p89 = scmp.eq.s32.totalorder %s30, 1
      %p90 = por %p88, %p89
      %p91 = scmp.ne.s32.totalorder %s82, %s83
      %p92 = scmp.eq.s32.totalorder %s30, 0
      %p93 = por %p91, %p92
      %p94 = scmp.ne.s32.totalorder %s82, %s83
      %p95 = scmp.eq.s32.totalorder %s31, 1
      %p96 = por %p94, %p95
      %p98 = scmp.ne.s32.totalorder %s83, %s97
      %p99 = scmp.eq.s32.totalorder %s31, 0
      %p100 = por %p98, %p99
      %s102 = sadd.s32 %s101, 1
      %p105 = scmp.eq.s32.totalorder %s25, 1
      %p106 = scmp.ne.s32.totalorder %s101, %s103
      %p107 = scmp.eq.s32.totalorder %s25, 0
      %p108 = por %p106, %p107
      %p109 = scmp.ne.s32.totalorder %s101, %s103
      %p110 = scmp.eq.s32.totalorder %s30, 1
      %p111 = por %p109, %p110
      %p112 = scmp.ne.s32.totalorder %s103, %s104
      %p113 = scmp.eq.s32.totalorder %s30, 0
      %p114 = por %p112, %p113
      %p115 = scmp.ne.s32.totalorder %s103, %s104
      %p116 = scmp.eq.s32.totalorder %s31, 1
      %p117 = por %p115, %p116
      %p119 = scmp.ne.s32.totalorder %s104, %s118
      %p120 = scmp.eq.s32.totalorder %s31, 0
      %p121 = por %p119, %p120
      %s123 = sadd.s32 %s122, 1
      %p126 = scmp.eq.s32.totalorder %s25, 1
      %p127 = scmp.ne.s32.totalorder %s122, %s124
      %p128 = scmp.eq.s32.totalorder %s25, 0
      %p129 = por %p127, %p128
      %p130 = scmp.ne.s32.totalorder %s122, %s124
      %p131 = scmp.eq.s32.totalorder %s30, 1
      %p132 = por %p130, %p131
      %p133 = scmp.ne.s32.totalorder %s124, %s125
      %p134 = scmp.eq.s32.totalorder %s30, 0
      %p135 = por %p133, %p134
      %p136 = scmp.ne.s32.totalorder %s124, %s125
      %p137 = scmp.eq.s32.totalorder %s31, 1
      %p138 = por %p136, %p137
      %p140 = scmp.ne.s32.totalorder %s125, %s139
      %p141 = scmp.eq.s32.totalorder %s31, 0
      %p142 = por %p140, %p141
      %s144 = sadd.s32 %s143, 1
      %p147 = scmp.eq.s32.totalorder %s25, 1
      %p148 = scmp.ne.s32.totalorder %s143, %s145
      %p149 = scmp.eq.s32.totalorder %s25, 0
      %p150 = por %p148, %p149
      %p151 = scmp.ne.s32.totalorder %s143, %s145
      %p152 = scmp.eq.s32.totalorder %s30, 1
      %p153 = por %p151, %p152
      %p154 = scmp.ne.s32.totalorder %s145, %s146
      %p155 = scmp.eq.s32.totalorder %s30, 0
      %p156 = por %p154, %p155
      %p157 = scmp.ne.s32.totalorder %s145, %s146
      %p158 = scmp.eq.s32.totalorder %s31, 1
      %p159 = por %p157, %p158
      %p161 = scmp.ne.s32.totalorder %s146, %s160
      %p162 = scmp.eq.s32.totalorder %s31, 0
      %p163 = por %p161, %p162
      %s165 = sadd.s32 %s164, 1
      %p168 = scmp.eq.s32.totalorder %s25, 1
      %p169 = scmp.ne.s32.totalorder %s164, %s166
      %p170 = scmp.eq.s32.totalorder %s25, 0
      %p171 = por %p169, %p170
      %p172 = scmp.ne.s32.totalorder %s164, %s166
      %p173 = scmp.eq.s32.totalorder %s30, 1
      %p174 = por %p172, %p173
      %p175 = scmp.ne.s32.totalorder %s166, %s167
      %p176 = scmp.eq.s32.totalorder %s30, 0
      %p177 = por %p175, %p176
      %p178 = scmp.ne.s32.totalorder %s166, %s167
      %p179 = scmp.eq.s32.totalorder %s31, 1
      %p180 = por %p178, %p179
      %p182 = scmp.ne.s32.totalorder %s167, %s181
      %p183 = scmp.eq.s32.totalorder %s31, 0
      %p184 = por %p182, %p183
      %s186 = sadd.s32 %s185, 1
      %p189 = scmp.eq.s32.totalorder %s25, 1
      %p190 = scmp.ne.s32.totalorder %s185, %s187
      %p191 = scmp.eq.s32.totalorder %s25, 0
      %p192 = por %p190, %p191
      %p193 = scmp.ne.s32.totalorder %s185, %s187
      %p194 = scmp.eq.s32.totalorder %s30, 1
      %p195 = por %p193, %p194
      %p196 = scmp.ne.s32.totalorder %s187, %s188
      %p197 = scmp.eq.s32.totalorder %s30, 0
      %p198 = por %p196, %p197
      %p199 = scmp.ne.s32.totalorder %s187, %s188
      %p200 = scmp.eq.s32.totalorder %s31, 1
      %p201 = por %p199, %p200
      %p203 = scmp.ne.s32.totalorder %s188, %s202
      %p204 = scmp.eq.s32.totalorder %s31, 0
      %p205 = por %p203, %p204
      %s207 = sadd.s32 %s206, 1
      %p210 = scmp.eq.s32.totalorder %s25, 1
      %p211 = scmp.ne.s32.totalorder %s206, %s208
      %p212 = scmp.eq.s32.totalorder %s25, 0
      %p213 = por %p211, %p212
      %p214 = scmp.ne.s32.totalorder %s206, %s208
      %p215 = scmp.eq.s32.totalorder %s30, 1
      %p216 = por %p214, %p215
      %p217 = scmp.ne.s32.totalorder %s208, %s209
      %p218 = scmp.eq.s32.totalorder %s30, 0
      %p219 = por %p217, %p218
      %p220 = scmp.ne.s32.totalorder %s208, %s209
      %p221 = scmp.eq.s32.totalorder %s31, 1
      %p222 = por %p220, %p221
      %p224 = scmp.ne.s32.totalorder %s209, %s223
      %p225 = scmp.eq.s32.totalorder %s31, 0
      %p226 = por %p224, %p225
      %s228 = sadd.s32 %s227, 1
      %p231 = scmp.eq.s32.totalorder %s25, 1
      %p232 = scmp.ne.s32.totalorder %s227, %s229
      %p233 = scmp.eq.s32.totalorder %s25, 0
      %p234 = por %p232, %p233
      %p235 = scmp.ne.s32.totalorder %s227, %s229
      %p236 = scmp.eq.s32.totalorder %s30, 1
      %p237 = por %p235, %p236
      %p238 = scmp.ne.s32.totalorder %s229, %s230
      %p239 = scmp.eq.s32.totalorder %s30, 0
      %p240 = por %p238, %p239
      %p241 = scmp.ne.s32.totalorder %s229, %s230
      %p242 = scmp.eq.s32.totalorder %s31, 1
      %p243 = por %p241, %p242
      %p245 = scmp.ne.s32.totalorder %s230, %s244
      %p246 = scmp.eq.s32.totalorder %s31, 0
      %p247 = por %p245, %p246
      %s249 = sadd.s32 %s248, 1
      %p252 = scmp.eq.s32.totalorder %s25, 1
      %p253 = scmp.ne.s32.totalorder %s248, %s250
      %p254 = scmp.eq.s32.totalorder %s25, 0
      %p255 = por %p253, %p254
      %p256 = scmp.ne.s32.totalorder %s248, %s250
      %p257 = scmp.eq.s32.totalorder %s30, 1
      %p258 = por %p256, %p257
      %p259 = scmp.ne.s32.totalorder %s250, %s251
      %p260 = scmp.eq.s32.totalorder %s30, 0
      %p261 = por %p259, %p260
      %p262 = scmp.ne.s32.totalorder %s250, %s251
      %p263 = scmp.eq.s32.totalorder %s31, 1
      %p264 = por %p262, %p263
      %p266 = scmp.ne.s32.totalorder %s251, %s265
      %p267 = scmp.eq.s32.totalorder %s31, 0
      %p268 = por %p266, %p267
      %s270 = sadd.s32 %s269, 1
      %p273 = scmp.eq.s32.totalorder %s25, 1
      %p274 = scmp.ne.s32.totalorder %s269, %s271
      %p275 = scmp.eq.s32.totalorder %s25, 0
      %p276 = por %p274, %p275
      %p277 = scmp.ne.s32.totalorder %s269, %s271
      %p278 = scmp.eq.s32.totalorder %s30, 1
      %p279 = por %p277, %p278
      %p280 = scmp.ne.s32.totalorder %s271, %s272
      %p281 = scmp.eq.s32.totalorder %s30, 0
      %p282 = por %p280, %p281
      %p283 = scmp.ne.s32.totalorder %s271, %s272
      %p284 = scmp.eq.s32.totalorder %s31, 1
      %p285 = por %p283, %p284
      %p287 = scmp.ne.s32.totalorder %s272, %s286
      %p288 = scmp.eq.s32.totalorder %s31, 0
      %p289 = por %p287, %p288
      %s291 = sadd.s32 %s290, 1
      %p294 = scmp.eq.s32.totalorder %s25, 1
      %p295 = scmp.ne.s32.totalorder %s290, %s292
      %p296 = scmp.eq.s32.totalorder %s25, 0
      %p297 = por %p295, %p296
      %p298 = scmp.ne.s32.totalorder %s290, %s292
      %p299 = scmp.eq.s32.totalorder %s30, 1
      %p300 = por %p298, %p299
      %p301 = scmp.ne.s32.totalorder %s292, %s293
      %p302 = scmp.eq.s32.totalorder %s30, 0
      %p303 = por %p301, %p302
      %p304 = scmp.ne.s32.totalorder %s292, %s293
      %p305 = scmp.eq.s32.totalorder %s31, 1
      %p306 = por %p304, %p305
      %p308 = scmp.ne.s32.totalorder %s293, %s307
      %p309 = scmp.eq.s32.totalorder %s31, 0
      %p310 = por %p308, %p309
      %s312 = sadd.s32 %s311, 1
      %p315 = scmp.eq.s32.totalorder %s25, 1
      %p316 = scmp.ne.s32.totalorder %s311, %s313
      %p317 = scmp.eq.s32.totalorder %s25, 0
      %p318 = por %p316, %p317
      %p319 = scmp.ne.s32.totalorder %s311, %s313
      %p320 = scmp.eq.s32.totalorder %s30, 1
      %p321 = por %p319, %p320
      %p322 = scmp.ne.s32.totalorder %s313, %s314
      %p323 = scmp.eq.s32.totalorder %s30, 0
      %p324 = por %p322, %p323
      %p325 = scmp.ne.s32.totalorder %s313, %s314
      %p326 = scmp.eq.s32.totalorder %s31, 1
      %p327 = por %p325, %p326
      %p329 = scmp.ne.s32.totalorder %s314, %s328
      %p330 = scmp.eq.s32.totalorder %s31, 0
      %p331 = por %p329, %p330
      %s332 = ssub.s32 %s25, %s32
      %p333 = scmp.eq.s32.totalorder %s332, 0
      %s335 = sadd.s32 %s334, 1
      %s336 = scalar_select %p333, %s334, %s335
      %p339 = pneg %p333
      %p340 = scmp.eq.s32.totalorder %s25, 1
      %p341 = por %p339, %p340
      %p342 = scmp.ne.s32.totalorder %s334, %s337
      %p343 = scmp.eq.s32.totalorder %s25, 0
      %p344 = por %p342, %p343
      %p345 = scmp.ne.s32.totalorder %s334, %s337
      %p346 = scmp.eq.s32.totalorder %s30, 1
      %p347 = por %p345, %p346
      %p348 = scmp.ne.s32.totalorder %s337, %s338
      %p349 = scmp.eq.s32.totalorder %s30, 0
      %p350 = por %p348, %p349
      %p351 = scmp.ne.s32.totalorder %s337, %s338
      %p352 = scmp.eq.s32.totalorder %s31, 1
      %p353 = por %p351, %p352
      %p355 = scmp.ne.s32.totalorder %s338, %s354
      %p356 = scmp.eq.s32.totalorder %s31, 0
      %p357 = por %p355, %p356
      %p358 = scmp.le.s32.totalorder 1, %s25
      %p359 = scmp.lt.s32.totalorder %s25, 3
      %p360 = pnand %p358, %p359
      %p361 = pneg %p360
      // Predicated region
      $region9: #{tpu_custom_call.1} parent=5 // pred_check
        _
      $region10: #{tpu_custom_call.1} parent=5 // pred_check_branch
        %363 = sbr.rel (%p360) target = $region12
      $region11: #{tpu_custom_call.1} parent=5 // pred_region
        %s364 = ssub.s32 %s25, 1
        // Predicated region
        $region13: #{tpu_custom_call.1} parent=11 // pred_check
          %p365 = pneg %p72
        $region14: #{tpu_custom_call.1} parent=11 // pred_check_branch
          %367 = sbr.rel (%p365) target = $region16
        $region15: #{tpu_custom_call.1} parent=11 // pred_region
          _
        $region16: #{tpu_custom_call.1} parent=11 // pred_fallthru
          _
        // Predicated region
        $region17: #{tpu_custom_call.1} parent=11 // pred_check
          %p368 = pneg %p93
        $region18: #{tpu_custom_call.1} parent=11 // pred_check_branch
          %370 = sbr.rel (%p368) target = $region20
        $region19: #{tpu_custom_call.1} parent=11 // pred_region
          _
        $region20: #{tpu_custom_call.1} parent=11 // pred_fallthru
          _
        // Predicated region
        $region21: #{tpu_custom_call.1} parent=11 // pred_check
          %p371 = pneg %p114
        $region22: #{tpu_custom_call.1} parent=11 // pred_check_branch
          %373 = sbr.rel (%p371) target = $region24
        $region23: #{tpu_custom_call.1} parent=11 // pred_region
          _
        $region24: #{tpu_custom_call.1} parent=11 // pred_fallthru
          _
        // Predicated region
        $region25: #{tpu_custom_call.1} parent=11 // pred_check
          %p374 = pneg %p135
        $region26: #{tpu_custom_call.1} parent=11 // pred_check_branch
          %376 = sbr.rel (%p374) target = $region28
        $region27: #{tpu_custom_call.1} parent=11 // pred_region
          _
        $region28: #{tpu_custom_call.1} parent=11 // pred_fallthru
          _
        // Predicated region
        $region29: #{tpu_custom_call.1} parent=11 // pred_check
          %p377 = pneg %p156
        $region30: #{tpu_custom_call.1} parent=11 // pred_check_branch
          %379 = sbr.rel (%p377) target = $region32
        $region31: #{tpu_custom_call.1} parent=11 // pred_region
          _
        $region32: #{tpu_custom_call.1} parent=11 // pred_fallthru
          _
        // Predicated region
        $region33: #{tpu_custom_call.1} parent=11 // pred_check
          %p380 = pneg %p177
        $region34: #{tpu_custom_call.1} parent=11 // pred_check_branch
          %382 = sbr.rel (%p380) target = $region36
        $region35: #{tpu_custom_call.1} parent=11 // pred_region
          _
        $region36: #{tpu_custom_call.1} parent=11 // pred_fallthru
          _
        // Predicated region
        $region37: #{tpu_custom_call.1} parent=11 // pred_check
          %p383 = pneg %p198
        $region38: #{tpu_custom_call.1} parent=11 // pred_check_branch
          %385 = sbr.rel (%p383) target = $region40
        $region39: #{tpu_custom_call.1} parent=11 // pred_region
          %s387 = ssub.s32 16, 16
          %388 = vsyncadd [#allocation4], %s387
          %s390 = sshll.u32 [#allocation3], 4
          %s391 = int_to_ptr.vmem [resolvable:$true] %s390
          %393 = dma.hbm_to_vmem [thread:$0]  %s7, 16, %s391, [#allocation4]
        $region40: #{tpu_custom_call.1} parent=11 // pred_fallthru
          _
        // Predicated region
        $region41: #{tpu_custom_call.1} parent=11 // pred_check
          %p394 = pneg %p219
        $region42: #{tpu_custom_call.1} parent=11 // pred_check_branch
          %396 = sbr.rel (%p394) target = $region44
        $region43: #{tpu_custom_call.1} parent=11 // pred_region
          %s398 = ssub.s32 16, 16
          %399 = vsyncadd [#allocation7], %s398
          %s401 = sshll.u32 [#allocation6], 4
          %s402 = int_to_ptr.vmem [resolvable:$true] %s401
          %404 = dma.hbm_to_vmem [thread:$0]  %s8, 16, %s402, [#allocation7]
        $region44: #{tpu_custom_call.1} parent=11 // pred_fallthru
          _
        // Predicated region
        $region45: #{tpu_custom_call.1} parent=11 // pred_check
          %p405 = pneg %p240
        $region46: #{tpu_custom_call.1} parent=11 // pred_check_branch
          %407 = sbr.rel (%p405) target = $region48
        $region47: #{tpu_custom_call.1} parent=11 // pred_region
          %s409 = ssub.s32 16, 16
          %410 = vsyncadd [#allocation7], %s409
          %s412 = sshll.u32 [#allocation8], 4
          %s413 = int_to_ptr.vmem [resolvable:$true] %s412
          %415 = dma.hbm_to_vmem [thread:$0]  %s9, 16, %s413, [#allocation7]
        $region48: #{tpu_custom_call.1} parent=11 // pred_fallthru
          _
        // Predicated region
        $region49: #{tpu_custom_call.1} parent=11 // pred_check
          %p416 = pneg %p261
        $region50: #{tpu_custom_call.1} parent=11 // pred_check_branch
          %418 = sbr.rel (%p416) target = $region52
        $region51: #{tpu_custom_call.1} parent=11 // pred_region
          _
        $region52: #{tpu_custom_call.1} parent=11 // pred_fallthru
          _
        // Predicated region
        $region53: #{tpu_custom_call.1} parent=11 // pred_check
          %p419 = pneg %p282
        $region54: #{tpu_custom_call.1} parent=11 // pred_check_branch
          %421 = sbr.rel (%p419) target = $region56
        $region55: #{tpu_custom_call.1} parent=11 // pred_region
          _
        $region56: #{tpu_custom_call.1} parent=11 // pred_fallthru
          _
        // Predicated region
        $region57: #{tpu_custom_call.1} parent=11 // pred_check
          %p422 = pneg %p303
        $region58: #{tpu_custom_call.1} parent=11 // pred_check_branch
          %424 = sbr.rel (%p422) target = $region60
        $region59: #{tpu_custom_call.1} parent=11 // pred_region
          _
        $region60: #{tpu_custom_call.1} parent=11 // pred_fallthru
          _
        // Predicated region
        $region61: #{tpu_custom_call.1} parent=11 // pred_check
          %p425 = pneg %p324
        $region62: #{tpu_custom_call.1} parent=11 // pred_check_branch
          %427 = sbr.rel (%p425) target = $region64
        $region63: #{tpu_custom_call.1} parent=11 // pred_region
          _
        $region64: #{tpu_custom_call.1} parent=11 // pred_fallthru
          _
      $region12: #{tpu_custom_call.1} parent=5 // pred_fallthru
        _
      %p428 = scmp.lt.s32.totalorder %s25, 2
      // Predicated region
      $region65: #{tpu_custom_call.1} parent=5 // pred_check
        %p429 = pneg %p428
      $region66: #{tpu_custom_call.1} parent=5 // pred_check_branch
        %431 = sbr.rel (%p429) target = $region68
      $region67: #{tpu_custom_call.1} parent=5 // pred_region
        // Predicated region
        $region69: #{tpu_custom_call.1} parent=67 // pred_check
          %p432 = pneg %p45
        $region70: #{tpu_custom_call.1} parent=67 // pred_check_branch
          %434 = sbr.rel (%p432) target = $region72
        $region71: #{tpu_custom_call.1} parent=67 // pred_region
          %p435 = scmp.lt.s32.totalorder %s25, 1
          %s436 = scalar_select %p435, %s25, 1
          %s437 = smul.addr %s436, 8
          %s438 = scalar_lea.vmem %s0, %s437
        $region72: #{tpu_custom_call.1} parent=67 // pred_fallthru
          _
      $region68: #{tpu_custom_call.1} parent=5 // pred_fallthru
        _
      %p439 = scmp.le.s32.totalorder 1, %s25
      %p440 = scmp.lt.s32.totalorder %s25, 3
      %p441 = pnand %p439, %p440
      %p442 = pneg %p441
      // Predicated region
      $region73: #{tpu_custom_call.1} parent=5 // pred_check
        _
      $region74: #{tpu_custom_call.1} parent=5 // pred_check_branch
        %444 = sbr.rel (%p441) target = $region76
      $region75: #{tpu_custom_call.1} parent=5 // pred_region
        %s445 = ssub.s32 %s25, 1
        // Predicated region
        $region77: #{tpu_custom_call.1} parent=75 // pred_check
          %p446 = pneg %p198
        $region78: #{tpu_custom_call.1} parent=75 // pred_check_branch
          %448 = sbr.rel (%p446) target = $region80
        $region79: #{tpu_custom_call.1} parent=75 // pred_region
          %449 = dma.done [#allocation4], 16
        $region80: #{tpu_custom_call.1} parent=75 // pred_fallthru
          _
        // Predicated region
        $region81: #{tpu_custom_call.1} parent=75 // pred_check
          %p450 = pneg %p219
        $region82: #{tpu_custom_call.1} parent=75 // pred_check_branch
          %452 = sbr.rel (%p450) target = $region84
        $region83: #{tpu_custom_call.1} parent=75 // pred_region
          %453 = dma.done [#allocation7], 16
        $region84: #{tpu_custom_call.1} parent=75 // pred_fallthru
          _
        // Predicated region
        $region85: #{tpu_custom_call.1} parent=75 // pred_check
          %p454 = pneg %p240
        $region86: #{tpu_custom_call.1} parent=75 // pred_check_branch
          %456 = sbr.rel (%p454) target = $region88
        $region87: #{tpu_custom_call.1} parent=75 // pred_region
          %457 = dma.done [#allocation7], 16
        $region88: #{tpu_custom_call.1} parent=75 // pred_fallthru
          _
        %p458 = scmp.lt.s32.totalorder %s30, 1
        %s459 = scalar_select %p458, %s30, 1
        %s460 = smul.addr %s459, 8
        %s461 = scalar_lea.vmem %s0, %s460
        %p462 = pneg %p51
        %p463 = pneg %p48
        %p464 = pneg %p72
        %p465 = pneg %p69
        %p466 = pneg %p93
        %p467 = pneg %p90
        %p468 = pneg %p114
        %p469 = pneg %p111
        %p470 = pneg %p135
        %p471 = pneg %p132
        %p472 = pneg %p156
        %p473 = pneg %p153
        %p474 = pneg %p177
        %p475 = pneg %p174
        %p476 = pneg %p198
        %p477 = pneg %p195
        %p478 = pneg %p219
        %p479 = pneg %p216
        %p480 = pneg %p240
        %p481 = pneg %p237
        %p482 = pneg %p261
        %p483 = pneg %p258
        %p484 = pneg %p282
        %p485 = pneg %p279
        %p486 = pneg %p303
        %p487 = pneg %p300
        %p488 = pneg %p324
        %p489 = pneg %p321
        %p490 = pneg %p350
        %p491 = pneg %p347
        %s492 = sand.u32 %s337, 1
        %s493 = scalar_lea.sflag [#allocation5], %s492
        %s494 = sand.u32 %s337, 1
        %s495 = smul.addr %s494, 8
        %s496 = scalar_lea.vmem [#allocation9], %s495
        %p497 = scmp.lt.s32.totalorder %s30, 1
        %s498 = scalar_select %p497, %s30, 1
        %s499 = smul.addr %s498, 8
        %s500 = scalar_lea.vmem %s0, %s499
        %v502 = vld [vmem:[%s500] sm:$0xff]
        %v503 = vld [vmem:[%s6] sm:$0x1]
        %v504 = vld [vmem:[#allocation3] sm:$0x1]
        %vm505 = vcmask 261120
        %v506 = vsel %vm505, %v502, 0.0
        %507 = vadd.xlane.f32.xlu0 %v506
        %v508 = vpop.xlane.xlu0 %507
        %v509 = vrcp.pop 32.0
        %v510 = vmul.f32 %v508, %v509
        %v511 = vsub.f32 %v502, %v510
        %v512 = vmul.f32 %v511, %v511
        %v513 = vsel %vm505, %v512, 0.0
        %514 = vadd.xlane.f32.xlu0 %v513
        %v515 = vpop.xlane.xlu0 %514
        %v516 = vmul.f32 %v515, %v509
        %v517 = vadd.f32 %v516, 1e-05
        %v518 = vrsqrt.pop %v517
        %v519 = vmul.f32 %v511, %v518
        %v521 = vlaneseq
        %v522 = vshrl.u32 %v521, 7
        %v523 = vsub.s32 0, %v522
        %v524 = vrot.slane %v503, %v523
        %v526 = vmul.f32 %v524, %v519
        %v528 = vlaneseq
        %v529 = vshrl.u32 %v528, 7
        %v530 = vsub.s32 0, %v529
        %v531 = vrot.slane %v504, %v530
        %v533 = vadd.f32 %v526, %v531
        %v534 = vpack.c.bf16 %v533, %v533
        %v535 = vld [vmem:[%s1] sm:$0xf]
        %v536 = vld [vmem:[%s1 + $0x4] sm:$0xf]
        %v537 = vld [vmem:[%s1 + $0x8] sm:$0xf]
        %v538 = vld [vmem:[%s1 + $0xc] sm:$0xf]
        %v543 = vunpack.c.l.b16 %v535
        %v544 = vunpack.c.l.b16 %v536
        %v545 = vunpack.c.l.b16 %v537
        %v546 = vunpack.c.l.b16 %v538
        %v547 = vpack.c.b16 %v544, %v543
        %v548 = vpack.c.b16 %v546, %v545
        %v552 = vsel %vm505, %v534, 0
        %554 = vmatprep.subr.bf16.mxu0 0
        %555 = vmatpush1.bf16.msra.mxu0 %v547
        %556 = vmatprep.subr.bf16.mxu0 0
        %557 = vmatpush1.bf16.msra.mxu0 %v548
        %558 = vmatprep.subr.bf16.mxu0 0
        %559 = vmatpush1.bf16.msra.mxu0 0
        %560 = vmatprep.subr.bf16.mxu0 0
        %561 = vmatpush1.bf16.msra.mxu0 0
        %562 = vmatprep.subr.bf16.mxu0 0
        %563 = vmatpush1.bf16.msra.mxu0 0
        %564 = vmatprep.subr.bf16.mxu0 0
        %565 = vmatpush1.bf16.msra.mxu0 0
        %566 = vmatprep.subr.bf16.mxu0 0
        %567 = vmatpush1.bf16.msra.mxu0 0
        %568 = vmatprep.subr.bf16.mxu0 0
        %569 = vmatpush1.bf16.msra.mxu0 0
        %570 = vmatprep.subr.bf16.mxu0 0
        %571 = vmatpush1.bf16.msra.mxu0 0
        %572 = vmatprep.subr.bf16.mxu0 0
        %573 = vmatpush1.bf16.msra.mxu0 0
        %574 = vmatprep.subr.bf16.mxu0 0
        %575 = vmatpush1.bf16.msra.mxu0 0
        %576 = vmatprep.subr.bf16.mxu0 0
        %577 = vmatpush1.bf16.msra.mxu0 0
        %578 = vmatprep.subr.bf16.mxu0 0
        %579 = vmatpush1.bf16.msra.mxu0 0
        %580 = vmatprep.subr.bf16.mxu0 0
        %581 = vmatpush1.bf16.msra.mxu0 0
        %582 = vmatprep.subr.bf16.mxu0 0
        %583 = vmatpush1.bf16.msra.mxu0 0
        %584 = vmatprep.subr.bf16.mxu0 0
        %585 = vmatpush1.bf16.msra.mxu0 0
        %586 = vmatprep.mubr.bf16.mxu0 0
        %587 = vmatmul.mubr.bf16.gmra.mrb[0].mxu0 %v552
        %v588 = vpop.f32.mrb[0].mxu0
        %v589 = vadd.f32 0.0, %v588
        %v590 = vpop.f32.mrb[0].mxu0
        %v591 = vpop.f32.mrb[0].mxu0
        %v592 = vpop.f32.mrb[0].mxu0
        %593 = vdwg.mxu0
        %v594 = vld [vmem:[%s2] sm:$0xf]
        %v595 = vld [vmem:[%s2 + $0x4] sm:$0xf]
        %v596 = vld [vmem:[%s2 + $0x8] sm:$0xf]
        %v597 = vld [vmem:[%s2 + $0xc] sm:$0xf]
        %v602 = vunpack.c.l.b16 %v594
        %v603 = vunpack.c.l.b16 %v595
        %v604 = vunpack.c.l.b16 %v596
        %v605 = vunpack.c.l.b16 %v597
        %v606 = vpack.c.b16 %v603, %v602
        %v607 = vpack.c.b16 %v605, %v604
        %610 = vmatprep.subr.bf16.mxu0 0
        %611 = vmatpush1.bf16.msra.mxu0 %v606
        %612 = vmatprep.subr.bf16.mxu0 0
        %613 = vmatpush1.bf16.msra.mxu0 %v607
        %614 = vmatprep.subr.bf16.mxu0 0
        %615 = vmatpush1.bf16.msra.mxu0 0
        %616 = vmatprep.subr.bf16.mxu0 0
        %617 = vmatpush1.bf16.msra.mxu0 0
        %618 = vmatprep.subr.bf16.mxu0 0
        %619 = vmatpush1.bf16.msra.mxu0 0
        %620 = vmatprep.subr.bf16.mxu0 0
        %621 = vmatpush1.bf16.msra.mxu0 0
        %622 = vmatprep.subr.bf16.mxu0 0
        %623 = vmatpush1.bf16.msra.mxu0 0
        %624 = vmatprep.subr.bf16.mxu0 0
        %625 = vmatpush1.bf16.msra.mxu0 0
        %626 = vmatprep.subr.bf16.mxu0 0
        %627 = vmatpush1.bf16.msra.mxu0 0
        %628 = vmatprep.subr.bf16.mxu0 0
        %629 = vmatpush1.bf16.msra.mxu0 0
        %630 = vmatprep.subr.bf16.mxu0 0
        %631 = vmatpush1.bf16.msra.mxu0 0
        %632 = vmatprep.subr.bf16.mxu0 0
        %633 = vmatpush1.bf16.msra.mxu0 0
        %634 = vmatprep.subr.bf16.mxu0 0
        %635 = vmatpush1.bf16.msra.mxu0 0
        %636 = vmatprep.subr.bf16.mxu0 0
        %637 = vmatpush1.bf16.msra.mxu0 0
        %638 = vmatprep.subr.bf16.mxu0 0
        %639 = vmatpush1.bf16.msra.mxu0 0
        %640 = vmatprep.subr.bf16.mxu0 0
        %641 = vmatpush1.bf16.msra.mxu0 0
        %642 = vmatprep.mubr.bf16.mxu0 0
        %643 = vmatmul.mubr.bf16.gmra.mrb[0].mxu0 %v552
        %v644 = vpop.f32.mrb[0].mxu0
        %v645 = vadd.f32 0.0, %v644
        %v646 = vpop.f32.mrb[0].mxu0
        %v647 = vpop.f32.mrb[0].mxu0
        %v648 = vpop.f32.mrb[0].mxu0
        %649 = vdwg.mxu0
        %v650 = vld [vmem:[%s3] sm:$0xf]
        %v651 = vld [vmem:[%s3 + $0x4] sm:$0xf]
        %v652 = vld [vmem:[%s3 + $0x8] sm:$0xf]
        %v653 = vld [vmem:[%s3 + $0xc] sm:$0xf]
        %v658 = vunpack.c.l.b16 %v650
        %v659 = vunpack.c.l.b16 %v651
        %v660 = vunpack.c.l.b16 %v652
        %v661 = vunpack.c.l.b16 %v653
        %v662 = vpack.c.b16 %v659, %v658
        %v663 = vpack.c.b16 %v661, %v660
        %666 = vmatprep.subr.bf16.mxu0 0
        %667 = vmatpush1.bf16.msra.mxu0 %v662
        %668 = vmatprep.subr.bf16.mxu0 0
        %669 = vmatpush1.bf16.msra.mxu0 %v663
        %670 = vmatprep.subr.bf16.mxu0 0
        %671 = vmatpush1.bf16.msra.mxu0 0
        %672 = vmatprep.subr.bf16.mxu0 0
        %673 = vmatpush1.bf16.msra.mxu0 0
        %674 = vmatprep.subr.bf16.mxu0 0
        %675 = vmatpush1.bf16.msra.mxu0 0
        %676 = vmatprep.subr.bf16.mxu0 0
        %677 = vmatpush1.bf16.msra.mxu0 0
        %678 = vmatprep.subr.bf16.mxu0 0
        %679 = vmatpush1.bf16.msra.mxu0 0
        %680 = vmatprep.subr.bf16.mxu0 0
        %681 = vmatpush1.bf16.msra.mxu0 0
        %682 = vmatprep.subr.bf16.mxu0 0
        %683 = vmatpush1.bf16.msra.mxu0 0
        %684 = vmatprep.subr.bf16.mxu0 0
        %685 = vmatpush1.bf16.msra.mxu0 0
        %686 = vmatprep.subr.bf16.mxu0 0
        %687 = vmatpush1.bf16.msra.mxu0 0
        %688 = vmatprep.subr.bf16.mxu0 0
        %689 = vmatpush1.bf16.msra.mxu0 0
        %690 = vmatprep.subr.bf16.mxu0 0
        %691 = vmatpush1.bf16.msra.mxu0 0
        %692 = vmatprep.subr.bf16.mxu0 0
        %693 = vmatpush1.bf16.msra.mxu0 0
        %694 = vmatprep.subr.bf16.mxu0 0
        %695 = vmatpush1.bf16.msra.mxu0 0
        %696 = vmatprep.subr.bf16.mxu0 0
        %697 = vmatpush1.bf16.msra.mxu0 0
        %698 = vmatprep.mubr.bf16.mxu0 0
        %699 = vmatmul.mubr.bf16.gmra.mrb[0].mxu0 %v552
        %v700 = vpop.f32.mrb[0].mxu0
        %v701 = vadd.f32 0.0, %v700
        %v702 = vpop.f32.mrb[0].mxu0
        %v703 = vpop.f32.mrb[0].mxu0
        %v704 = vpop.f32.mrb[0].mxu0
        %705 = vdwg.mxu0
        %v706 = vmul.f32 %v589, 0.35355338
        %v707 = vpack.c.bf16 %v706, %v706
        %v708 = vpack.c.bf16 %v645, %v645
        %v709 = vpack.c.bf16 %v701, %v701
        %vm710 = vcmask 64512
        %v712 = vsel %vm710, %v707, 0
        %v715 = vsel %vm710, %v708, 0
        %717 = vmatprep.subr.bf16.mxu0 0
        %718 = vmatpush1.bf16.xpose.msra.mxu0 %v715
        %719 = vmatprep.subr.bf16.mxu0 0
        %720 = vmatpush1.bf16.xpose.msra.mxu0 0
        %721 = vmatprep.subr.bf16.mxu0 0
        %722 = vmatpush1.bf16.xpose.msra.mxu0 0
        %723 = vmatprep.subr.bf16.mxu0 0
        %724 = vmatpush1.bf16.xpose.msra.mxu0 0
        %725 = vmatprep.subr.bf16.mxu0 0
        %726 = vmatpush1.bf16.xpose.msra.mxu0 0
        %727 = vmatprep.subr.bf16.mxu0 0
        %728 = vmatpush1.bf16.xpose.msra.mxu0 0
        %729 = vmatprep.subr.bf16.mxu0 0
        %730 = vmatpush1.bf16.xpose.msra.mxu0 0
        %731 = vmatprep.subr.bf16.mxu0 0
        %732 = vmatpush1.bf16.xpose.msra.mxu0 0
        %733 = vmatprep.subr.bf16.mxu0 0
        %734 = vmatpush1.bf16.xpose.msra.mxu0 0
        %735 = vmatprep.subr.bf16.mxu0 0
        %736 = vmatpush1.bf16.xpose.msra.mxu0 0
        %737 = vmatprep.subr.bf16.mxu0 0
        %738 = vmatpush1.bf16.xpose.msra.mxu0 0
        %739 = vmatprep.subr.bf16.mxu0 0
        %740 = vmatpush1.bf16.xpose.msra.mxu0 0
        %741 = vmatprep.subr.bf16.mxu0 0
        %742 = vmatpush1.bf16.xpose.msra.mxu0 0
        %743 = vmatprep.subr.bf16.mxu0 0
        %744 = vmatpush1.bf16.xpose.msra.mxu0 0
        %745 = vmatprep.subr.bf16.mxu0 0
        %746 = vmatpush1.bf16.xpose.msra.mxu0 0
        %747 = vmatprep.subr.bf16.mxu0 0
        %748 = vmatpush1.bf16.xpose.msra.mxu0 0
        %749 = vmatprep.mubr.bf16.mxu0 0
        %750 = vmatmul.mubr.bf16.gmra.mrb[0].mxu0 %v712
        %v751 = vpop.f32.mrb[0].mxu0
        %v752 = vadd.f32 0.0, %v751
        %v753 = vpop.f32.mrb[0].mxu0
        %v754 = vpop.f32.mrb[0].mxu0
        %v755 = vpop.f32.mrb[0].mxu0
        %756 = vdwg.mxu0
        %v757 = vlaneseq
        %v758 = vshrl.u32 %v757, 7
        %v759 = vlaneseq
        %v760 = vand.u32 %v759, 127
        %vm761 = vcmp.gt.s32.totalorder %v760, %v758
        %v762 = vsel %vm761, -1e+30, %v752
        %v763 = vsel %vm710, %v762, -inf
        %764 = vmax.xlane.f32.xlu0 %v763
        %v765 = vpop.xlane.xlu0 %764
        %v766 = vmax.f32 %v765, -1e+30
        %v767 = vsub.f32 -1e+30, %v766
        %v768 = vmul.f32 %v767, 1.442695
        %v769 = vpow.pop %v768
        %v770 = vsub.f32 %v762, %v766
        %v771 = vmul.f32 %v770, 1.442695
        %v772 = vpow.pop %v771
        %v773 = vmul.f32 %v769, 0.0
        %v774 = vsel %vm710, %v772, 0.0
        %775 = vadd.xlane.f32.xlu0 %v774
        %v776 = vpop.xlane.xlu0 %775
        %v777 = vadd.f32 %v773, %v776
        %v778 = vpack.c.bf16 %v772, %v772
        %v780 = vsel %vm710, %v778, 0
        %vm782 = vcmask 1043456
        %v784 = vsel %vm782, %v709, 0
        %786 = vmatprep.subr.bf16.mxu0 0
        %787 = vmatpush1.bf16.msra.mxu0 %v784
        %788 = vmatprep.subr.bf16.mxu0 0
        %789 = vmatpush1.bf16.msra.mxu0 0
        %790 = vmatprep.subr.bf16.mxu0 0
        %791 = vmatpush1.bf16.msra.mxu0 0
        %792 = vmatprep.subr.bf16.mxu0 0
        %793 = vmatpush1.bf16.msra.mxu0 0
        %794 = vmatprep.subr.bf16.mxu0 0
        %795 = vmatpush1.bf16.msra.mxu0 0
        %796 = vmatprep.subr.bf16.mxu0 0
        %797 = vmatpush1.bf16.msra.mxu0 0
        %798 = vmatprep.subr.bf16.mxu0 0
        %799 = vmatpush1.bf16.msra.mxu0 0
        %800 = vmatprep.subr.bf16.mxu0 0
        %801 = vmatpush1.bf16.msra.mxu0 0
        %802 = vmatprep.subr.bf16.mxu0 0
        %803 = vmatpush1.bf16.msra.mxu0 0
        %804 = vmatprep.subr.bf16.mxu0 0
        %805 = vmatpush1.bf16.msra.mxu0 0
        %806 = vmatprep.subr.bf16.mxu0 0
        %807 = vmatpush1.bf16.msra.mxu0 0
        %808 = vmatprep.subr.bf16.mxu0 0
        %809 = vmatpush1.bf16.msra.mxu0 0
        %810 = vmatprep.subr.bf16.mxu0 0
        %811 = vmatpush1.bf16.msra.mxu0 0
        %812 = vmatprep.subr.bf16.mxu0 0
        %813 = vmatpush1.bf16.msra.mxu0 0
        %814 = vmatprep.subr.bf16.mxu0 0
        %815 = vmatpush1.bf16.msra.mxu0 0
        %816 = vmatprep.subr.bf16.mxu0 0
        %817 = vmatpush1.bf16.msra.mxu0 0
        %818 = vmatprep.mubr.bf16.mxu0 0
        %819 = vmatmul.mubr.bf16.gmra.mrb[0].mxu0 %v780
        %v820 = vpop.f32.mrb[0].mxu0
        %v821 = vadd.f32 0.0, %v820
        %v822 = vpop.f32.mrb[0].mxu0
        %v823 = vpop.f32.mrb[0].mxu0
        %v824 = vpop.f32.mrb[0].mxu0
        %825 = vdwg.mxu0
        %v826 = vadd.f32 %v773, %v821
        %v827 = vrcp.pop %v777
        %v828 = vmul.f32 %v826, %v827
        %829 = vst.msk [vmem:[#allocation2] sm:$0xff] %vm710, %v828
        %831 = vrot.lane.b32.xlu0 %v707, 120
        %v832 = vpop.permute.xlu0 %831
        %834 = vrot.lane.b32.xlu0 %v708, 120
        %v835 = vpop.permute.xlu0 %834
        %v837 = vsel %vm710, %v832, 0
        %v840 = vsel %vm710, %v835, 0
        %842 = vmatprep.subr.bf16.mxu0 0
        %843 = vmatpush1.bf16.xpose.msra.mxu0 %v840
        %844 = vmatprep.subr.bf16.mxu0 0
        %845 = vmatpush1.bf16.xpose.msra.mxu0 0
        %846 = vmatprep.subr.bf16.mxu0 0
        %847 = vmatpush1.bf16.xpose.msra.mxu0 0
        %848 = vmatprep.subr.bf16.mxu0 0
        %849 = vmatpush1.bf16.xpose.msra.mxu0 0
        %850 = vmatprep.subr.bf16.mxu0 0
        %851 = vmatpush1.bf16.xpose.msra.mxu0 0
        %852 = vmatprep.subr.bf16.mxu0 0
        %853 = vmatpush1.bf16.xpose.msra.mxu0 0
        %854 = vmatprep.subr.bf16.mxu0 0
        %855 = vmatpush1.bf16.xpose.msra.mxu0 0
        %856 = vmatprep.subr.bf16.mxu0 0
        %857 = vmatpush1.bf16.xpose.msra.mxu0 0
        %858 = vmatprep.subr.bf16.mxu0 0
        %859 = vmatpush1.bf16.xpose.msra.mxu0 0
        %860 = vmatprep.subr.bf16.mxu0 0
        %861 = vmatpush1.bf16.xpose.msra.mxu0 0
        %862 = vmatprep.subr.bf16.mxu0 0
        %863 = vmatpush1.bf16.xpose.msra.mxu0 0
        %864 = vmatprep.subr.bf16.mxu0 0
        %865 = vmatpush1.bf16.xpose.msra.mxu0 0
        %866 = vmatprep.subr.bf16.mxu0 0
        %867 = vmatpush1.bf16.xpose.msra.mxu0 0
        %868 = vmatprep.subr.bf16.mxu0 0
        %869 = vmatpush1.bf16.xpose.msra.mxu0 0
        %870 = vmatprep.subr.bf16.mxu0 0
        %871 = vmatpush1.bf16.xpose.msra.mxu0 0
        %872 = vmatprep.subr.bf16.mxu0 0
        %873 = vmatpush1.bf16.xpose.msra.mxu0 0
        %874 = vmatprep.mubr.bf16.mxu0 0
        %875 = vmatmul.mubr.bf16.gmra.mrb[0].mxu0 %v837
        %v876 = vpop.f32.mrb[0].mxu0
        %v877 = vadd.f32 0.0, %v876
        %v878 = vpop.f32.mrb[0].mxu0
        %v879 = vpop.f32.mrb[0].mxu0
        %v880 = vpop.f32.mrb[0].mxu0
        %881 = vdwg.mxu0
        %v882 = vsel %vm761, -1e+30, %v877
        %v883 = vsel %vm710, %v882, -inf
        %884 = vmax.xlane.f32.xlu0 %v883
        %v885 = vpop.xlane.xlu0 %884
        %v886 = vmax.f32 %v885, -1e+30
        %v887 = vsub.f32 -1e+30, %v886
        %v888 = vmul.f32 %v887, 1.442695
        %v889 = vpow.pop %v888
        %v890 = vsub.f32 %v882, %v886
        %v891 = vmul.f32 %v890, 1.442695
        %v892 = vpow.pop %v891
        %v893 = vmul.f32 %v889, 0.0
        %v894 = vsel %vm710, %v892, 0.0
        %895 = vadd.xlane.f32.xlu0 %v894
        %v896 = vpop.xlane.xlu0 %895
        %v897 = vadd.f32 %v893, %v896
        %v898 = vpack.c.bf16 %v892, %v892
        %900 = vrot.lane.b32.xlu0 %v709, 120
        %v901 = vpop.permute.xlu0 %900
        %v903 = vsel %vm710, %v898, 0
        %v906 = vsel %vm782, %v901, 0
        %908 = vmatprep.subr.bf16.mxu0 0
        %909 = vmatpush1.bf16.msra.mxu0 %v906
        %910 = vmatprep.subr.bf16.mxu0 0
        %911 = vmatpush1.bf16.msra.mxu0 0
        %912 = vmatprep.subr.bf16.mxu0 0
        %913 = vmatpush1.bf16.msra.mxu0 0
        %914 = vmatprep.subr.bf16.mxu0 0
        %915 = vmatpush1.bf16.msra.mxu0 0
        %916 = vmatprep.subr.bf16.mxu0 0
        %917 = vmatpush1.bf16.msra.mxu0 0
        %918 = vmatprep.subr.bf16.mxu0 0
        %919 = vmatpush1.bf16.msra.mxu0 0
        %920 = vmatprep.subr.bf16.mxu0 0
        %921 = vmatpush1.bf16.msra.mxu0 0
        %922 = vmatprep.subr.bf16.mxu0 0
        %923 = vmatpush1.bf16.msra.mxu0 0
        %924 = vmatprep.subr.bf16.mxu0 0
        %925 = vmatpush1.bf16.msra.mxu0 0
        %926 = vmatprep.subr.bf16.mxu0 0
        %927 = vmatpush1.bf16.msra.mxu0 0
        %928 = vmatprep.subr.bf16.mxu0 0
        %929 = vmatpush1.bf16.msra.mxu0 0
        %930 = vmatprep.subr.bf16.mxu0 0
        %931 = vmatpush1.bf16.msra.mxu0 0
        %932 = vmatprep.subr.bf16.mxu0 0
        %933 = vmatpush1.bf16.msra.mxu0 0
        %934 = vmatprep.subr.bf16.mxu0 0
        %935 = vmatpush1.bf16.msra.mxu0 0
        %936 = vmatprep.subr.bf16.mxu0 0
        %937 = vmatpush1.bf16.msra.mxu0 0
        %938 = vmatprep.subr.bf16.mxu0 0
        %939 = vmatpush1.bf16.msra.mxu0 0
        %940 = vmatprep.mubr.bf16.mxu0 0
        %941 = vmatmul.mubr.bf16.gmra.mrb[0].mxu0 %v903
        %v942 = vpop.f32.mrb[0].mxu0
        %v943 = vadd.f32 0.0, %v942
        %v944 = vpop.f32.mrb[0].mxu0
        %v945 = vpop.f32.mrb[0].mxu0
        %v946 = vpop.f32.mrb[0].mxu0
        %947 = vdwg.mxu0
        %v948 = vadd.f32 %v893, %v943
        %v949 = vrcp.pop %v897
        %v950 = vmul.f32 %v948, %v949
        %952 = vrot.lane.b32.xlu0 %v950, 8
        %v953 = vpop.permute.xlu0 %952
        %vm955 = vcmask 130112
        %956 = vst.msk [vmem:[#allocation2] sm:$0xff] %vm955, %v953
        %957 = vrot.lane.b32.xlu0 %v707, 112
        %v958 = vpop.permute.xlu0 %957
        %959 = vrot.lane.b32.xlu0 %v708, 112
        %v960 = vpop.permute.xlu0 %959
        %v962 = vsel %vm710, %v958, 0
        %v965 = vsel %vm710, %v960, 0
        %967 = vmatprep.subr.bf16.mxu0 0
        %968 = vmatpush1.bf16.xpose.msra.mxu0 %v965
        %969 = vmatprep.subr.bf16.mxu0 0
        %970 = vmatpush1.bf16.xpose.msra.mxu0 0
        %971 = vmatprep.subr.bf16.mxu0 0
        %972 = vmatpush1.bf16.xpose.msra.mxu0 0
        %973 = vmatprep.subr.bf16.mxu0 0
        %974 = vmatpush1.bf16.xpose.msra.mxu0 0
        %975 = vmatprep.subr.bf16.mxu0 0
        %976 = vmatpush1.bf16.xpose.msra.mxu0 0
        %977 = vmatprep.subr.bf16.mxu0 0
        %978 = vmatpush1.bf16.xpose.msra.mxu0 0
        %979 = vmatprep.subr.bf16.mxu0 0
        %980 = vmatpush1.bf16.xpose.msra.mxu0 0
        %981 = vmatprep.subr.bf16.mxu0 0
        %982 = vmatpush1.bf16.xpose.msra.mxu0 0
        %983 = vmatprep.subr.bf16.mxu0 0
        %984 = vmatpush1.bf16.xpose.msra.mxu0 0
        %985 = vmatprep.subr.bf16.mxu0 0
        %986 = vmatpush1.bf16.xpose.msra.mxu0 0
        %987 = vmatprep.subr.bf16.mxu0 0
        %988 = vmatpush1.bf16.xpose.msra.mxu0 0
        %989 = vmatprep.subr.bf16.mxu0 0
        %990 = vmatpush1.bf16.xpose.msra.mxu0 0
        %991 = vmatprep.subr.bf16.mxu0 0
        %992 = vmatpush1.bf16.xpose.msra.mxu0 0
        %993 = vmatprep.subr.bf16.mxu0 0
        %994 = vmatpush1.bf16.xpose.msra.mxu0 0
        %995 = vmatprep.subr.bf16.mxu0 0
        %996 = vmatpush1.bf16.xpose.msra.mxu0 0
        %997 = vmatprep.subr.bf16.mxu0 0
        %998 = vmatpush1.bf16.xpose.msra.mxu0 0
        %999 = vmatprep.mubr.bf16.mxu0 0
        %1000 = vmatmul.mubr.bf16.gmra.mrb[0].mxu0 %v962
        %v1001 = vpop.f32.mrb[0].mxu0
        %v1002 = vadd.f32 0.0, %v1001
        %v1003 = vpop.f32.mrb[0].mxu0
        %v1004 = vpop.f32.mrb[0].mxu0
        %v1005 = vpop.f32.mrb[0].mxu0
        %1006 = vdwg.mxu0
        %v1007 = vsel %vm761, -1e+30, %v1002
        %v1008 = vsel %vm710, %v1007, -inf
        %1009 = vmax.xlane.f32.xlu0 %v1008
        %v1010 = vpop.xlane.xlu0 %1009
        %v1011 = vmax.f32 %v1010, -1e+30
        %v1012 = vsub.f32 -1e+30, %v1011
        %v1013 = vmul.f32 %v1012, 1.442695
        %v1014 = vpow.pop %v1013
        %v1015 = vsub.f32 %v1007, %v1011
        %v1016 = vmul.f32 %v1015, 1.442695
        %v1017 = vpow.pop %v1016
        %v1018 = vmul.f32 %v1014, 0.0
        %v1019 = vsel %vm710, %v1017, 0.0
        %1020 = vadd.xlane.f32.xlu0 %v1019
        %v1021 = vpop.xlane.xlu0 %1020
        %v1022 = vadd.f32 %v1018, %v1021
        %v1023 = vpack.c.bf16 %v1017, %v1017
        %1024 = vrot.lane.b32.xlu0 %v709, 112
        %v1025 = vpop.permute.xlu0 %1024
        %v1027 = vsel %vm710, %v1023, 0
        %v1030 = vsel %vm782, %v1025, 0
        %1032 = vmatprep.subr.bf16.mxu0 0
        %1033 = vmatpush1.bf16.msra.mxu0 %v1030
        %1034 = vmatprep.subr.bf16.mxu0 0
        %1035 = vmatpush1.bf16.msra.mxu0 0
        %1036 = vmatprep.subr.bf16.mxu0 0
        %1037 = vmatpush1.bf16.msra.mxu0 0
        %1038 = vmatprep.subr.bf16.mxu0 0
        %1039 = vmatpush1.bf16.msra.mxu0 0
        %1040 = vmatprep.subr.bf16.mxu0 0
        %1041 = vmatpush1.bf16.msra.mxu0 0
        %1042 = vmatprep.subr.bf16.mxu0 0
        %1043 = vmatpush1.bf16.msra.mxu0 0
        %1044 = vmatprep.subr.bf16.mxu0 0
        %1045 = vmatpush1.bf16.msra.mxu0 0
        %1046 = vmatprep.subr.bf16.mxu0 0
        %1047 = vmatpush1.bf16.msra.mxu0 0
        %1048 = vmatprep.subr.bf16.mxu0 0
        %1049 = vmatpush1.bf16.msra.mxu0 0
        %1050 = vmatprep.subr.bf16.mxu0 0
        %1051 = vmatpush1.bf16.msra.mxu0 0
        %1052 = vmatprep.subr.bf16.mxu0 0
        %1053 = vmatpush1.bf16.msra.mxu0 0
        %1054 = vmatprep.subr.bf16.mxu0 0
        %1055 = vmatpush1.bf16.msra.mxu0 0
        %1056 = vmatprep.subr.bf16.mxu0 0
        %1057 = vmatpush1.bf16.msra.mxu0 0
        %1058 = vmatprep.subr.bf16.mxu0 0
        %1059 = vmatpush1.bf16.msra.mxu0 0
        %1060 = vmatprep.subr.bf16.mxu0 0
        %1061 = vmatpush1.bf16.msra.mxu0 0
        %1062 = vmatprep.subr.bf16.mxu0 0
        %1063 = vmatpush1.bf16.msra.mxu0 0
        %1064 = vmatprep.mubr.bf16.mxu0 0
        %1065 = vmatmul.mubr.bf16.gmra.mrb[0].mxu0 %v1027
        %v1066 = vpop.f32.mrb[0].mxu0
        %v1067 = vadd.f32 0.0, %v1066
        %v1068 = vpop.f32.mrb[0].mxu0
        %v1069 = vpop.f32.mrb[0].mxu0
        %v1070 = vpop.f32.mrb[0].mxu0
        %1071 = vdwg.mxu0
        %v1072 = vadd.f32 %v1018, %v1067
        %v1073 = vrcp.pop %v1022
        %v1074 = vmul.f32 %v1072, %v1073
        %1076 = vrot.lane.b32.xlu0 %v1074, 16
        %v1077 = vpop.permute.xlu0 %1076
        %vm1079 = vcmask 195712
        %1080 = vst.msk [vmem:[#allocation2] sm:$0xff] %vm1079, %v1077
        %1081 = vrot.lane.b32.xlu0 %v707, 104
        %v1082 = vpop.permute.xlu0 %1081
        %1083 = vrot.lane.b32.xlu0 %v708, 104
        %v1084 = vpop.permute.xlu0 %1083
        %v1086 = vsel %vm710, %v1082, 0
        %v1089 = vsel %vm710, %v1084, 0
        %1091 = vmatprep.subr.bf16.mxu0 0
        %1092 = vmatpush1.bf16.xpose.msra.mxu0 %v1089
        %1093 = vmatprep.subr.bf16.mxu0 0
        %1094 = vmatpush1.bf16.xpose.msra.mxu0 0
        %1095 = vmatprep.subr.bf16.mxu0 0
        %1096 = vmatpush1.bf16.xpose.msra.mxu0 0
        %1097 = vmatprep.subr.bf16.mxu0 0
        %1098 = vmatpush1.bf16.xpose.msra.mxu0 0
        %1099 = vmatprep.subr.bf16.mxu0 0
        %1100 = vmatpush1.bf16.xpose.msra.mxu0 0
        %1101 = vmatprep.subr.bf16.mxu0 0
        %1102 = vmatpush1.bf16.xpose.msra.mxu0 0
        %1103 = vmatprep.subr.bf16.mxu0 0
        %1104 = vmatpush1.bf16.xpose.msra.mxu0 0
        %1105 = vmatprep.subr.bf16.mxu0 0
        %1106 = vmatpush1.bf16.xpose.msra.mxu0 0
        %1107 = vmatprep.subr.bf16.mxu0 0
        %1108 = vmatpush1.bf16.xpose.msra.mxu0 0
        %1109 = vmatprep.subr.bf16.mxu0 0
        %1110 = vmatpush1.bf16.xpose.msra.mxu0 0
        %1111 = vmatprep.subr.bf16.mxu0 0
        %1112 = vmatpush1.bf16.xpose.msra.mxu0 0
        %1113 = vmatprep.subr.bf16.mxu0 0
        %1114 = vmatpush1.bf16.xpose.msra.mxu0 0
        %1115 = vmatprep.subr.bf16.mxu0 0
        %1116 = vmatpush1.bf16.xpose.msra.mxu0 0
        %1117 = vmatprep.subr.bf16.mxu0 0
        %1118 = vmatpush1.bf16.xpose.msra.mxu0 0
        %1119 = vmatprep.subr.bf16.mxu0 0
        %1120 = vmatpush1.bf16.xpose.msra.mxu0 0
        %1121 = vmatprep.subr.bf16.mxu0 0
        %1122 = vmatpush1.bf16.xpose.msra.mxu0 0
        %1123 = vmatprep.mubr.bf16.mxu0 0
        %1124 = vmatmul.mubr.bf16.gmra.mrb[0].mxu0 %v1086
        %v1125 = vpop.f32.mrb[0].mxu0
        %v1126 = vadd.f32 0.0, %v1125
        %v1127 = vpop.f32.mrb[0].mxu0
        %v1128 = vpop.f32.mrb[0].mxu0
        %v1129 = vpop.f32.mrb[0].mxu0
        %1130 = vdwg.mxu0
        %v1131 = vsel %vm761, -1e+30, %v1126
        %v1132 = vsel %vm710, %v1131, -inf
        %1133 = vmax.xlane.f32.xlu0 %v1132
        %v1134 = vpop.xlane.xlu0 %1133
        %v1135 = vmax.f32 %v1134, -1e+30
        %v1136 = vsub.f32 -1e+30, %v1135
        %v1137 = vmul.f32 %v1136, 1.442695
        %v1138 = vpow.pop %v1137
        %v1139 = vsub.f32 %v1131, %v1135
        %v1140 = vmul.f32 %v1139, 1.442695
        %v1141 = vpow.pop %v1140
        %v1142 = vmul.f32 %v1138, 0.0
        %v1143 = vsel %vm710, %v1141, 0.0
        %1144 = vadd.xlane.f32.xlu0 %v1143
        %v1145 = vpop.xlane.xlu0 %1144
        %v1146 = vadd.f32 %v1142, %v1145
        %v1147 = vpack.c.bf16 %v1141, %v1141
        %1148 = vrot.lane.b32.xlu0 %v709, 104
        %v1149 = vpop.permute.xlu0 %1148
        %v1151 = vsel %vm710, %v1147, 0
        %v1154 = vsel %vm782, %v1149, 0
        %1156 = vmatprep.subr.bf16.mxu0 0
        %1157 = vmatpush1.bf16.msra.mxu0 %v1154
        %1158 = vmatprep.subr.bf16.mxu0 0
        %1159 = vmatpush1.bf16.msra.mxu0 0
        %1160 = vmatprep.subr.bf16.mxu0 0
        %1161 = vmatpush1.bf16.msra.mxu0 0
        %1162 = vmatprep.subr.bf16.mxu0 0
        %1163 = vmatpush1.bf16.msra.mxu0 0
        %1164 = vmatprep.subr.bf16.mxu0 0
        %1165 = vmatpush1.bf16.msra.mxu0 0
        %1166 = vmatprep.subr.bf16.mxu0 0
        %1167 = vmatpush1.bf16.msra.mxu0 0
        %1168 = vmatprep.subr.bf16.mxu0 0
        %1169 = vmatpush1.bf16.msra.mxu0 0
        %1170 = vmatprep.subr.bf16.mxu0 0
        %1171 = vmatpush1.bf16.msra.mxu0 0
        %1172 = vmatprep.subr.bf16.mxu0 0
        %1173 = vmatpush1.bf16.msra.mxu0 0
        %1174 = vmatprep.subr.bf16.mxu0 0
        %1175 = vmatpush1.bf16.msra.mxu0 0
        %1176 = vmatprep.subr.bf16.mxu0 0
        %1177 = vmatpush1.bf16.msra.mxu0 0
        %1178 = vmatprep.subr.bf16.mxu0 0
        %1179 = vmatpush1.bf16.msra.mxu0 0
        %1180 = vmatprep.subr.bf16.mxu0 0
        %1181 = vmatpush1.bf16.msra.mxu0 0
        %1182 = vmatprep.subr.bf16.mxu0 0
        %1183 = vmatpush1.bf16.msra.mxu0 0
        %1184 = vmatprep.subr.bf16.mxu0 0
        %1185 = vmatpush1.bf16.msra.mxu0 0
        %1186 = vmatprep.subr.bf16.mxu0 0
        %1187 = vmatpush1.bf16.msra.mxu0 0
        %1188 = vmatprep.mubr.bf16.mxu0 0
        %1189 = vmatmul.mubr.bf16.gmra.mrb[0].mxu0 %v1151
        %v1190 = vpop.f32.mrb[0].mxu0
        %v1191 = vadd.f32 0.0, %v1190
        %v1192 = vpop.f32.mrb[0].mxu0
        %v1193 = vpop.f32.mrb[0].mxu0
        %v1194 = vpop.f32.mrb[0].mxu0
        %1195 = vdwg.mxu0
        %v1196 = vadd.f32 %v1142, %v1191
        %v1197 = vrcp.pop %v1146
        %v1198 = vmul.f32 %v1196, %v1197
        %1200 = vrot.lane.b32.xlu0 %v1198, 24
        %v1201 = vpop.permute.xlu0 %1200
        %vm1203 = vcmask 261312
        %1204 = vst.msk [vmem:[#allocation2] sm:$0xff] %vm1203, %v1201
        %v1205 = vld [vmem:[#allocation2] sm:$0xff]
        %v1206 = vpack.c.bf16 %v1205, %v1205
        %v1207 = vld [vmem:[%s4] sm:$0xf]
        %v1208 = vld [vmem:[%s4 + $0x4] sm:$0xf]
        %v1209 = vld [vmem:[%s4 + $0x8] sm:$0xf]
        %v1210 = vld [vmem:[%s4 + $0xc] sm:$0xf]
        %v1211 = vld [vmem:[%s5] sm:$0x1]
        %v1213 = vlaneseq
        %v1214 = vshrl.u32 %v1213, 7
        %v1215 = vsub.s32 0, %v1214
        %v1216 = vrot.slane %v1211, %v1215
        %v1222 = vunpack.c.l.b16 %v1207
        %v1223 = vunpack.c.l.b16 %v1208
        %v1224 = vunpack.c.l.b16 %v1209
        %v1225 = vunpack.c.l.b16 %v1210
        %v1226 = vpack.c.b16 %v1223, %v1222
        %v1227 = vpack.c.b16 %v1225, %v1224
        %v1231 = vsel %vm505, %v1206, 0
        %1233 = vmatprep.subr.bf16.mxu0 0
        %1234 = vmatpush1.bf16.msra.mxu0 %v1226
        %1235 = vmatprep.subr.bf16.mxu0 0
        %1236 = vmatpush1.bf16.msra.mxu0 %v1227
        %1237 = vmatprep.subr.bf16.mxu0 0
        %1238 = vmatpush1.bf16.msra.mxu0 0
        %1239 = vmatprep.subr.bf16.mxu0 0
        %1240 = vmatpush1.bf16.msra.mxu0 0
        %1241 = vmatprep.subr.bf16.mxu0 0
        %1242 = vmatpush1.bf16.msra.mxu0 0
        %1243 = vmatprep.subr.bf16.mxu0 0
        %1244 = vmatpush1.bf16.msra.mxu0 0
        %1245 = vmatprep.subr.bf16.mxu0 0
        %1246 = vmatpush1.bf16.msra.mxu0 0
        %1247 = vmatprep.subr.bf16.mxu0 0
        %1248 = vmatpush1.bf16.msra.mxu0 0
        %1249 = vmatprep.subr.bf16.mxu0 0
        %1250 = vmatpush1.bf16.msra.mxu0 0
        %1251 = vmatprep.subr.bf16.mxu0 0
        %1252 = vmatpush1.bf16.msra.mxu0 0
        %1253 = vmatprep.subr.bf16.mxu0 0
        %1254 = vmatpush1.bf16.msra.mxu0 0
        %1255 = vmatprep.subr.bf16.mxu0 0
        %1256 = vmatpush1.bf16.msra.mxu0 0
        %1257 = vmatprep.subr.bf16.mxu0 0
        %1258 = vmatpush1.bf16.msra.mxu0 0
        %1259 = vmatprep.subr.bf16.mxu0 0
        %1260 = vmatpush1.bf16.msra.mxu0 0
        %1261 = vmatprep.subr.bf16.mxu0 0
        %1262 = vmatpush1.bf16.msra.mxu0 0
        %1263 = vmatprep.subr.bf16.mxu0 0
        %1264 = vmatpush1.bf16.msra.mxu0 0
        %1265 = vmatprep.mubr.bf16.mxu0 0
        %1266 = vmatmul.mubr.bf16.gmra.mrb[0].mxu0 %v1231
        %v1267 = vpop.f32.mrb[0].mxu0
        %v1268 = vadd.f32 %v1216, %v1267
        %v1269 = vpop.f32.mrb[0].mxu0
        %v1270 = vpop.f32.mrb[0].mxu0
        %v1271 = vpop.f32.mrb[0].mxu0
        %1272 = vdwg.mxu0
        %v1273 = vadd.f32 %v502, %v1268
        %v1274 = vld [vmem:[#allocation6] sm:$0x1]
        %v1275 = vld [vmem:[#allocation8] sm:$0x1]
        %v1276 = vsel %vm505, %v1273, 0.0
        %1277 = vadd.xlane.f32.xlu0 %v1276
        %v1278 = vpop.xlane.xlu0 %1277
        %v1279 = vmul.f32 %v1278, %v509
        %v1280 = vsub.f32 %v1273, %v1279
        %v1281 = vmul.f32 %v1280, %v1280
        %v1282 = vsel %vm505, %v1281, 0.0
        %1283 = vadd.xlane.f32.xlu0 %v1282
        %v1284 = vpop.xlane.xlu0 %1283
        %v1285 = vmul.f32 %v1284, %v509
        %v1286 = vadd.f32 %v1285, 1e-05
        %v1287 = vrsqrt.pop %v1286
        %v1288 = vmul.f32 %v1280, %v1287
        %v1290 = vlaneseq
        %v1291 = vshrl.u32 %v1290, 7
        %v1292 = vsub.s32 0, %v1291
        %v1293 = vrot.slane %v1274, %v1292
        %v1295 = vmul.f32 %v1293, %v1288
        %v1297 = vlaneseq
        %v1298 = vshrl.u32 %v1297, 7
        %v1299 = vsub.s32 0, %v1298
        %v1300 = vrot.slane %v1275, %v1299
        %v1302 = vadd.f32 %v1295, %v1300
        %v1303 = vpack.c.bf16 %v1302, %v1302
        %v1304 = vld [vmem:[%s10] sm:$0xf]
        %v1305 = vld [vmem:[%s10 + $0x4] sm:$0xf]
        %v1306 = vld [vmem:[%s10 + $0x8] sm:$0xf]
        %v1307 = vld [vmem:[%s10 + $0xc] sm:$0xf]
        %v1308 = vld [vmem:[%s11] sm:$0x1]
        %v1310 = vlaneseq
        %v1311 = vshrl.u32 %v1310, 7
        %v1312 = vsub.s32 0, %v1311
        %v1313 = vrot.slane %v1308, %v1312
        %v1319 = vunpack.c.l.b16 %v1304
        %v1320 = vunpack.c.l.b16 %v1305
        %v1321 = vunpack.c.l.b16 %v1306
        %v1322 = vunpack.c.l.b16 %v1307
        %v1323 = vpack.c.b16 %v1320, %v1319
        %v1324 = vpack.c.b16 %v1322, %v1321
        %v1328 = vsel %vm505, %v1303, 0
        %1330 = vmatprep.subr.bf16.mxu0 0
        %1331 = vmatpush1.bf16.msra.mxu0 %v1323
        %1332 = vmatprep.subr.bf16.mxu0 0
        %1333 = vmatpush1.bf16.msra.mxu0 %v1324
        %1334 = vmatprep.subr.bf16.mxu0 0
        %1335 = vmatpush1.bf16.msra.mxu0 0
        %1336 = vmatprep.subr.bf16.mxu0 0
        %1337 = vmatpush1.bf16.msra.mxu0 0
        %1338 = vmatprep.subr.bf16.mxu0 0
        %1339 = vmatpush1.bf16.msra.mxu0 0
        %1340 = vmatprep.subr.bf16.mxu0 0
        %1341 = vmatpush1.bf16.msra.mxu0 0
        %1342 = vmatprep.subr.bf16.mxu0 0
        %1343 = vmatpush1.bf16.msra.mxu0 0
        %1344 = vmatprep.subr.bf16.mxu0 0
        %1345 = vmatpush1.bf16.msra.mxu0 0
        %1346 = vmatprep.subr.bf16.mxu0 0
        %1347 = vmatpush1.bf16.msra.mxu0 0
        %1348 = vmatprep.subr.bf16.mxu0 0
        %1349 = vmatpush1.bf16.msra.mxu0 0
        %1350 = vmatprep.subr.bf16.mxu0 0
        %1351 = vmatpush1.bf16.msra.mxu0 0
        %1352 = vmatprep.subr.bf16.mxu0 0
        %1353 = vmatpush1.bf16.msra.mxu0 0
        %1354 = vmatprep.subr.bf16.mxu0 0
        %1355 = vmatpush1.bf16.msra.mxu0 0
        %1356 = vmatprep.subr.bf16.mxu0 0
        %1357 = vmatpush1.bf16.msra.mxu0 0
        %1358 = vmatprep.subr.bf16.mxu0 0
        %1359 = vmatpush1.bf16.msra.mxu0 0
        %1360 = vmatprep.subr.bf16.mxu0 0
        %1361 = vmatpush1.bf16.msra.mxu0 0
        %1362 = vmatprep.mubr.bf16.mxu0 0
        %1363 = vmatmul.mubr.bf16.gmra.mrb[0].mxu0 %v1328
        %v1364 = vpop.f32.mrb[0].mxu0
        %v1365 = vadd.f32 %v1313, %v1364
        %v1366 = vpop.f32.mrb[0].mxu0
        %v1367 = vpop.f32.mrb[0].mxu0
        %v1368 = vpop.f32.mrb[0].mxu0
        %1369 = vdwg.mxu0
        %v1370 = vmul.f32 %v1365, 0.5
        %v1371 = vmul.f32 %v1365, %v1365
        %v1372 = vmul.f32 %v1371, %v1365
        %v1373 = vmul.f32 %v1372, 0.044715
        %v1374 = vadd.f32 %v1365, %v1373
        %v1375 = vmul.f32 %v1374, 0.7978846
        %v1376 = vtanh.pop %v1375
        %v1377 = vadd.f32 %v1376, 1.0
        %v1378 = vmul.f32 %v1370, %v1377
        %v1379 = vpack.c.bf16 %v1378, %v1378
        %v1380 = vld [vmem:[%s12] sm:$0xf]
        %v1381 = vld [vmem:[%s12 + $0x4] sm:$0xf]
        %v1382 = vld [vmem:[%s12 + $0x8] sm:$0xf]
        %v1383 = vld [vmem:[%s12 + $0xc] sm:$0xf]
        %v1384 = vld [vmem:[%s12 + $0x10] sm:$0xf]
        %v1385 = vld [vmem:[%s12 + $0x14] sm:$0xf]
        %v1386 = vld [vmem:[%s12 + $0x18] sm:$0xf]
        %v1387 = vld [vmem:[%s12 + $0x1c] sm:$0xf]
        %v1388 = vld [vmem:[%s12 + $0x20] sm:$0xf]
        %v1389 = vld [vmem:[%s12 + $0x24] sm:$0xf]
        %v1390 = vld [vmem:[%s12 + $0x28] sm:$0xf]
        %v1391 = vld [vmem:[%s12 + $0x2c] sm:$0xf]
        %v1392 = vld [vmem:[%s12 + $0x30] sm:$0xf]
        %v1393 = vld [vmem:[%s12 + $0x34] sm:$0xf]
        %v1394 = vld [vmem:[%s12 + $0x38] sm:$0xf]
        %v1395 = vld [vmem:[%s12 + $0x3c] sm:$0xf]
        %v1396 = vld [vmem:[%s13] sm:$0x1]
        %v1398 = vlaneseq
        %v1399 = vshrl.u32 %v1398, 7
        %v1400 = vsub.s32 0, %v1399
        %v1401 = vrot.slane %v1396, %v1400
        %v1419 = vunpack.c.l.b16 %v1380
        %v1420 = vunpack.c.l.b16 %v1381
        %v1421 = vunpack.c.l.b16 %v1382
        %v1422 = vunpack.c.l.b16 %v1383
        %v1423 = vunpack.c.l.b16 %v1384
        %v1424 = vunpack.c.l.b16 %v1385
        %v1425 = vunpack.c.l.b16 %v1386
        %v1426 = vunpack.c.l.b16 %v1387
        %v1427 = vunpack.c.l.b16 %v1388
        %v1428 = vunpack.c.l.b16 %v1389
        %v1429 = vunpack.c.l.b16 %v1390
        %v1430 = vunpack.c.l.b16 %v1391
        %v1431 = vunpack.c.l.b16 %v1392
        %v1432 = vunpack.c.l.b16 %v1393
        %v1433 = vunpack.c.l.b16 %v1394
        %v1434 = vunpack.c.l.b16 %v1395
        %v1435 = vpack.c.b16 %v1420, %v1419
        %v1436 = vpack.c.b16 %v1422, %v1421
        %v1437 = vpack.c.b16 %v1424, %v1423
        %v1438 = vpack.c.b16 %v1426, %v1425
        %v1439 = vpack.c.b16 %v1428, %v1427
        %v1440 = vpack.c.b16 %v1430, %v1429
        %v1441 = vpack.c.b16 %v1432, %v1431
        %v1442 = vpack.c.b16 %v1434, %v1433
        %1451 = vmatprep.subr.bf16.mxu0 0
        %1452 = vmatpush1.bf16.msra.mxu0 %v1435
        %1453 = vmatprep.subr.bf16.mxu0 0
        %1454 = vmatpush1.bf16.msra.mxu0 %v1436
        %1455 = vmatprep.subr.bf16.mxu0 0
        %1456 = vmatpush1.bf16.msra.mxu0 %v1437
        %1457 = vmatprep.subr.bf16.mxu0 0
        %1458 = vmatpush1.bf16.msra.mxu0 %v1438
        %1459 = vmatprep.subr.bf16.mxu0 0
        %1460 = vmatpush1.bf16.msra.mxu0 %v1439
        %1461 = vmatprep.subr.bf16.mxu0 0
        %1462 = vmatpush1.bf16.msra.mxu0 %v1440
        %1463 = vmatprep.subr.bf16.mxu0 0
        %1464 = vmatpush1.bf16.msra.mxu0 %v1441
        %1465 = vmatprep.subr.bf16.mxu0 0
        %1466 = vmatpush1.bf16.msra.mxu0 %v1442
        %1467 = vmatprep.subr.bf16.mxu0 0
        %1468 = vmatpush1.bf16.msra.mxu0 0
        %1469 = vmatprep.subr.bf16.mxu0 0
        %1470 = vmatpush1.bf16.msra.mxu0 0
        %1471 = vmatprep.subr.bf16.mxu0 0
        %1472 = vmatpush1.bf16.msra.mxu0 0
        %1473 = vmatprep.subr.bf16.mxu0 0
        %1474 = vmatpush1.bf16.msra.mxu0 0
        %1475 = vmatprep.subr.bf16.mxu0 0
        %1476 = vmatpush1.bf16.msra.mxu0 0
        %1477 = vmatprep.subr.bf16.mxu0 0
        %1478 = vmatpush1.bf16.msra.mxu0 0
        %1479 = vmatprep.subr.bf16.mxu0 0
        %1480 = vmatpush1.bf16.msra.mxu0 0
        %1481 = vmatprep.subr.bf16.mxu0 0
        %1482 = vmatpush1.bf16.msra.mxu0 0
        %1483 = vmatprep.mubr.bf16.mxu0 0
        %1484 = vmatmul.mubr.bf16.gmra.mrb[0].mxu0 %v1379
        %v1485 = vpop.f32.mrb[0].mxu0
        %v1486 = vadd.f32 %v1401, %v1485
        %v1487 = vpop.f32.mrb[0].mxu0
        %v1488 = vpop.f32.mrb[0].mxu0
        %v1489 = vpop.f32.mrb[0].mxu0
        %1490 = vdwg.mxu0
        %v1491 = vadd.f32 %v1273, %v1486
        %1492 = vst.msk [vmem:[%s496] sm:$0xff] %vm505, %v1491
        %s1493 = sand.u32 %s337, 1
        %s1494 = scalar_lea.sflag [#allocation5], %s1493
        %s1495 = sand.u32 %s337, 1
        %s1496 = smul.addr %s1495, 8
        %s1497 = scalar_lea.vmem [#allocation9], %s1496
        // Predicated region
        $region89: #{tpu_custom_call.1} parent=75 // pred_check
          %p1498 = pneg %p347
        $region90: #{tpu_custom_call.1} parent=75 // pred_check_branch
          %1500 = sbr.rel (%p1498) target = $region92
        $region91: #{tpu_custom_call.1} parent=75 // pred_region
          %s1502 = ssub.s32 128, 128
          %1503 = vsyncadd %s1494, %s1502
          %s1504 = smul.addr %s30, 128
          %s1505 = scalar_lea.hbm %s14, %s1504
          %s1507 = sshll.u32 %s1497, 4
          %s1508 = int_to_ptr.vmem [resolvable:$true] %s1507
          %1510 = dma.vmem_to_hbm [thread:$0]  %s1508, 128, %s1505, %s1494
        $region92: #{tpu_custom_call.1} parent=75 // pred_fallthru
          _
      $region76: #{tpu_custom_call.1} parent=5 // pred_fallthru
        _
      %p1511 = scmp.le.s32.totalorder 2, %s25
      // Predicated region
      $region93: #{tpu_custom_call.1} parent=5 // pred_check
        %p1512 = pneg %p1511
      $region94: #{tpu_custom_call.1} parent=5 // pred_check_branch
        %1514 = sbr.rel (%p1512) target = $region96
      $region95: #{tpu_custom_call.1} parent=5 // pred_region
        %s1515 = ssub.s32 %s25, 2
        // Predicated region
        $region97: #{tpu_custom_call.1} parent=95 // pred_check
          %p1516 = pneg %p353
        $region98: #{tpu_custom_call.1} parent=95 // pred_check_branch
          %1518 = sbr.rel (%p1516) target = $region100
        $region99: #{tpu_custom_call.1} parent=95 // pred_region
          %s1519 = sand.u32 %s338, 1
          %s1520 = scalar_lea.sflag [#allocation5], %s1519
          %s1521 = sand.u32 %s338, 1
          %s1522 = smul.addr %s1521, 8
          %s1523 = scalar_lea.vmem [#allocation9], %s1522
          %1524 = dma.done %s1520, 128
        $region100: #{tpu_custom_call.1} parent=95 // pred_fallthru
          _
      $region96: #{tpu_custom_call.1} parent=5 // pred_fallthru
        _
    $region6: #{tpu_custom_call.1} parent=1 // loop_footer
      %s29 = sadd.s32 1, %s25
    $region7: #{tpu_custom_call.1} parent=1 // loop_footer_branch
      %24 = sbr.rel target = $region3
    $region8: #{tpu_custom_call.1} parent=1 // loop_exit
      _
    %1525 = vsyncpa [#allocation4], 1
    %s1526 = scalar_lea.sflag [#allocation4], 1
    %1527 = vsyncpa %s1526, 1
    %1528 = vsyncpa [#allocation7], 1
    %1529 = vsyncpa [#allocation5], 1
    %s1530 = scalar_lea.sflag [#allocation5], 1
    %1531 = vsyncpa %s1530, 1

</llo_original>
